<compile_context>
chip_gen: v5e
topology: v5e:2x2
jax: 0.10.0
libtpu: 0.0.40
codegen_flags: <defaults>
</compile_context>

<pallas_src>
import math

import jax
import jax.numpy as jnp
from jax.experimental import pallas as pl
from jax.experimental.pallas import tpu as pltpu


def _round_up(x, m):
    return ((x + m - 1) // m) * m


# --------------------------------------------------------------------------- #
# Pallas kernels
# --------------------------------------------------------------------------- #
def _conv_pool_fc_kernel(x_ref, cw_ref, fcw_ref, fcb_ref, o_ref):
    """Fused conv3x3(+eval-BN+bias) + ReLU + 2x2/2 max-pool + FC + ReLU, one batch tile.

    x_ref:   (4, K+1, TB*P_pad)   bf16 pooled-im2col slab, one per pooling phase;
                                  columns ordered (b, p); last row is a constant 1
                                  (conv bias folded into the matmul).
    cw_ref:  (cout, K+1)          bf16 BN-folded conv weight, bias as last column.
    fcw_ref: (cout, P_pad, F_pad) f32 FC weight regrouped per conv channel.
    fcb_ref: (1, F_pad)           f32 FC bias.
    o_ref:   (TB, F_pad)          f32 encoder output tile.
    """
    tb, f_pad = o_ref.shape
    cout, p_pad, _ = fcw_ref.shape

    cw = cw_ref[...]
    # One MXU pass per pooling phase over the whole batch tile.
    y0 = jnp.dot(cw, x_ref[0], preferred_element_type=jnp.float32)
    y1 = jnp.dot(cw, x_ref[1], preferred_element_type=jnp.float32)
    y2 = jnp.dot(cw, x_ref[2], preferred_element_type=jnp.float32)
    y3 = jnp.dot(cw, x_ref[3], preferred_element_type=jnp.float32)

    # MaxPool2d(2,2) == elementwise max over the 4 phases; ReLU commutes with max.
    pooled = jnp.maximum(jnp.maximum(y0, y1), jnp.maximum(y2, y3))
    pooled = jnp.maximum(pooled, 0.0)                        # (cout, TB*P_pad), f32

    # Row-major unflatten of the lane dim: rows ordered (c, b), 128 lanes per row.
    fc_in = pooled.reshape(cout * tb, p_pad)

    # FC: out[b, f] = sum_{c,p} pooled[c, b*P_pad + p] * fcw[c, p, f] + fcb[f]
    # as `cout` batch-tall MXU matmuls (static unroll, cout in {10, 4}).
    acc = jnp.zeros((tb, f_pad), jnp.float32)
    for c in range(cout):
        acc = acc + jnp.dot(fc_in[c * tb:(c + 1) * tb, :], fcw_ref[c],
                            preferred_element_type=jnp.float32)
    o_ref[...] = jnp.maximum(acc + fcb_ref[...], 0.0).astype(o_ref.dtype)


def _fc_relu_kernel(x_ref, w_ref, b_ref, o_ref):
    """out = ReLU(x @ W + b) for one batch tile — a single MXU matmul."""
    y = jnp.dot(x_ref[...], w_ref[...], preferred_element_type=jnp.float32)
    o_ref[...] = jnp.maximum(y + b_ref[...], 0.0).astype(o_ref.dtype)


# --------------------------------------------------------------------------- #
# Glue: parameter init, phase-major im2col, wrappers
# --------------------------------------------------------------------------- #
def init_params(key, width, height, out_feature, mode):
    """Deterministic synthetic parameters matching state_encoder.__init__ shapes."""
    ks = jax.random.split(key, 8)
    if mode in (1, 2):
        cin, cout = (8, 10) if mode == 1 else (1, 4)
        fan_in = (width // 2 - 1) * (height // 2 - 1) * cout
        return dict(
            conv_w=jax.random.normal(ks[0], (cout, cin, 3, 3), jnp.float32) * 0.1,
            conv_b=jax.random.normal(ks[1], (cout,), jnp.float32) * 0.1,
            fc_w=jax.random.normal(ks[2], (out_feature, fan_in), jnp.float32) * 0.05,
            fc_b=jax.random.normal(ks[3], (out_feature,), jnp.float32) * 0.05,
            bn=dict(gamma=1.0 + 0.1 * jax.random.normal(ks[4], (cout,), jnp.float32),
                    beta=0.1 * jax.random.normal(ks[5], (cout,), jnp.float32),
                    mean=0.1 * jax.random.normal(ks[6], (cout,), jnp.float32),
                    var=jax.random.uniform(ks[7], (cout,), jnp.float32, 0.5, 1.5),
                    eps=1e-5),
        )
    fan_in = width * height
    return dict(
        fc_w=jax.random.normal(ks[2], (out_feature, fan_in), jnp.float32) * 0.05,
        fc_b=jax.random.normal(ks[3], (out_feature,), jnp.float32) * 0.05,
    )


def _build_phase_slabs(state_padded, p_pad, compute_dtype):
    """(B_pad, C, H, W) -> (4, C*9+1, B_pad*P_pad) pooled-im2col slabs, phase-major.

    Columns of the last dim are ordered (b, p) with the pooled grid lane-padded to
    P_pad; a trailing constant-1 row folds the conv bias into the matmul.  Only the
    tiny raw input is transposed (to channel-major); the expanded slab is written
    once, directly in kernel-consumption order.
    """
    Bp, C, H, W = state_padded.shape
    Hp, Wp = (H - 2) // 2, (W - 2) // 2
    P = Hp * Wp
    x = jnp.transpose(state_padded, (1, 0, 2, 3))            # (C, B_pad, H, W)
    phases = []
    for a in range(2):
        for pb in range(2):
            taps = []
            for di in range(3):
                for dj in range(3):
                    patch = x[:, :, a + di: a + di + 2 * Hp: 2,
                                    pb + dj: pb + dj + 2 * Wp: 2]   # (C, B_pad, Hp, Wp)
                    taps.append(patch.reshape(C, Bp, P))
            t = jnp.stack(taps, axis=1)                              # (C, 9, B_pad, P)
            t = jnp.pad(t, ((0, 0), (0, 0), (0, 0), (0, p_pad - P)))
            slab = t.reshape(C * 9, Bp * p_pad)                      # rows (c,tap), cols (b,p)
            ones = jnp.ones((1, Bp * p_pad), slab.dtype)             # folded-bias row
            phases.append(jnp.concatenate([slab, ones], axis=0))     # (K+1, B_pad*P_pad)
    return jnp.stack(phases, axis=0).astype(compute_dtype)           # (4, K+1, B_pad*P_pad)


def _fc_relu(x, w_pad, b_pad, out_feature, batch_tile):
    """ReLU(x @ w_pad + b_pad)[:, :out_feature] via a batch-tiled single-matmul kernel."""
    B, K = x.shape
    F_pad = w_pad.shape[1]
    tb = min(_round_up(batch_tile, 8), _round_up(B, 8))
    B_pad = _round_up(B, tb)
    if B_pad != B:
        x = jnp.pad(x, ((0, B_pad - B), (0, 0)))
    nbt = B_pad // tb
    cost = pl.CostEstimate(
        flops=2 * B_pad * K * F_pad, transcendentals=0,
        bytes_accessed=int(x.size * x.dtype.itemsize + w_pad.size * w_pad.dtype.itemsize
                           + b_pad.size * 4 + B_pad * F_pad * 4))
    out = pl.pallas_call(
        _fc_relu_kernel,
        out_shape=jax.ShapeDtypeStruct((B_pad, F_pad), jnp.float32),
        grid=(nbt,),
        in_specs=[
            pl.BlockSpec((tb, K), lambda i: (i, 0)),
            pl.BlockSpec((K, F_pad), lambda i: (0, 0)),
            pl.BlockSpec((1, F_pad), lambda i: (0, 0)),
        ],
        out_specs=pl.BlockSpec((tb, F_pad), lambda i: (i, 0)),
        compiler_params=pltpu.CompilerParams(
            dimension_semantics=("parallel",),
            vmem_limit_bytes=32 * 1024 * 1024),
        cost_estimate=cost,
    )(x, w_pad, b_pad)
    return out[:B, :out_feature]


def state_encoder_forward(state, params, mode, *, batch_tile=32, fc_batch_tile=128,
                          compute_dtype=jnp.bfloat16):
    """Pallas implementation of state_encoder.forward (eval-mode BN)."""
    B = state.shape[0]
    F = params["fc_w"].shape[0]
    F_pad = _round_up(F, 128)
    fcb = jnp.pad(params["fc_b"].astype(jnp.float32), (0, F_pad - F)).reshape(1, F_pad)

    if mode in (1, 2):
        _, C, H, W = state.shape
        Hp, Wp = (H - 2) // 2, (W - 2) // 2
        P = Hp * Wp
        P_pad = _round_up(P, 128)
        cout = params["conv_w"].shape[0]
        K = C * 9

        # Fold eval-mode BatchNorm into the conv weight/bias; fold the bias into the
        # matmul via the constant-1 im2col row.
        bn = params["bn"]
        s = bn["gamma"] / jnp.sqrt(bn["var"] + bn["eps"])                  # (cout,)
        w2 = (params["conv_w"] * s[:, None, None, None]).reshape(cout, K)
        b2 = (params["conv_b"] - bn["mean"]) * s + bn["beta"]
        cw = jnp.concatenate([w2, b2[:, None]], axis=1).astype(compute_dtype)

        # FC weight regrouped to (cout, P_pad, F_pad); zero rows on padded p / padded
        # F columns make the non-zero junk in padded pooled lanes harmless.
        fcw = params["fc_w"].reshape(F, cout, P).transpose(1, 2, 0)        # (cout, P, F)
        fcw = jnp.pad(fcw, ((0, 0), (0, P_pad - P), (0, F_pad - F))).astype(jnp.float32)

        tb = min(_round_up(batch_tile, 8), _round_up(B, 8))
        B_pad = _round_up(B, tb)
        nbt = B_pad // tb
        state_p = jnp.pad(state.astype(jnp.float32),
                          ((0, B_pad - B), (0, 0), (0, 0), (0, 0)))
        slabs = _build_phase_slabs(state_p, P_pad, compute_dtype)          # (4,K+1,B_pad*P_pad)

        itemsize = jnp.dtype(compute_dtype).itemsize
        cost = pl.CostEstimate(
            flops=2 * cout * (K + 1) * 4 * B_pad * P_pad
                  + 2 * B_pad * cout * P_pad * F_pad,
            transcendentals=0,
            bytes_accessed=int(slabs.size * itemsize + cw.size * itemsize
                               + fcw.size * 4 + fcb.size * 4 + B_pad * F_pad * 4))

        out = pl.pallas_call(
            _conv_pool_fc_kernel,
            out_shape=jax.ShapeDtypeStruct((B_pad, F_pad), jnp.float32),
            grid=(nbt,),
            in_specs=[
                pl.BlockSpec((4, K + 1, tb * P_pad), lambda i: (0, 0, i)),
                pl.BlockSpec((cout, K + 1), lambda i: (0, 0)),
                pl.BlockSpec((cout, P_pad, F_pad), lambda i: (0, 0, 0)),
                pl.BlockSpec((1, F_pad), lambda i: (0, 0)),
            ],
            out_specs=pl.BlockSpec((tb, F_pad), lambda i: (i, 0)),
            compiler_params=pltpu.CompilerParams(
                dimension_semantics=("parallel",),
                vmem_limit_bytes=32 * 1024 * 1024),
            cost_estimate=cost,
        )(slabs, cw, fcw, fcb)
        return out[:B, :F]

    # mode == 3: flatten + linear + ReLU, one batch-tiled matmul.
    D = math.prod(state.shape[1:])
    xf = state.reshape(B, D).astype(jnp.float32)
    w_pad = jnp.pad(params["fc_w"].T.astype(jnp.float32), ((0, 0), (0, F_pad - F)))
    return _fc_relu(xf, w_pad, fcb, F, fc_batch_tile)


# --------------------------------------------------------------------------- #
# Pure-JAX reference (for correctness check only)
# --------------------------------------------------------------------------- #
def _reference(state, params, mode):
    if mode in (1, 2):
        bn = params["bn"]
        y = jax.lax.conv_general_dilated(
            state, params["conv_w"], window_strides=(1, 1), padding="VALID",
            dimension_numbers=("NCHW", "OIHW", "NCHW"))
        y = y + params["conv_b"][None, :, None, None]
        s = bn["gamma"] / jnp.sqrt(bn["var"] + bn["eps"])
        y = (y - bn["mean"][None, :, None, None]) * s[None, :, None, None] \
            + bn["beta"][None, :, None, None]
        y = jnp.maximum(y, 0.0)
        y = jax.lax.reduce_window(y, -jnp.inf, jax.lax.max,
                                  (1, 1, 2, 2), (1, 1, 2, 2), "VALID")
        flat = y.reshape(y.shape[0], -1)
    else:
        flat = state.reshape(state.shape[0], -1)
    return jnp.maximum(flat @ params["fc_w"].T + params["fc_b"], 0.0)


# --------------------------------------------------------------------------- #
if __name__ == "__main__":
    key = jax.random.PRNGKey(0)
    B, width, height, out_feature = 2, 16, 16, 32
    k_in, k_par = jax.random.split(key)

    # mode 1: state is (B, 8, H, W) NCHW
    state1 = jax.random.normal(k_in, (B, 8, height, width), jnp.float32)
    params1 = init_params(k_par, width, height, out_feature, mode=1)
    out1 = jax.block_until_ready(state_encoder_forward(state1, params1, mode=1))
    ref1 = _reference(state1, params1, mode=1)
    assert out1.shape == (B, out_feature), out1.shape
    assert bool(jnp.allclose(out1, ref1, rtol=2e-2, atol=2e-2)), "mode-1 mismatch vs reference"

    # mode 2: single-channel conv variant
    state2 = jax.random.normal(k_in, (B, 1, height, width), jnp.float32)
    params2 = init_params(k_par, width, height, out_feature, mode=2)
    out2 = jax.block_until_ready(state_encoder_forward(state2, params2, mode=2))
    ref2 = _reference(state2, params2, mode=2)
    assert out2.shape == (B, out_feature), out2.shape
    assert bool(jnp.allclose(out2, ref2, rtol=2e-2, atol=2e-2)), "mode-2 mismatch vs reference"

    # mode 3: flatten + linear + ReLU
    state3 = jax.random.normal(k_in, (B, 1, height, width), jnp.float32)
    params3 = init_params(k_par, width, height, out_feature, mode=3)
    out3 = jax.block_until_ready(state_encoder_forward(state3, params3, mode=3))
    ref3 = _reference(state3, params3, mode=3)
    assert out3.shape == (B, out_feature), out3.shape
    assert bool(jnp.allclose(out3, ref3, rtol=2e-2, atol=2e-2)), "mode-3 mismatch vs reference"

    print("KERNEL_OK")
</pallas_src>

<mosaic_0001>
module attributes {stable_mosaic.version = 11 : i64} {
  func.func @_conv_pool_fc_kernel(%arg0: i32, %arg1: memref<4x73x1024xbf16, #tpu.memory_space<vmem>>, %arg2: memref<10x73xbf16, #tpu.memory_space<vmem>>, %arg3: memref<10x128x128xf32, #tpu.memory_space<vmem>>, %arg4: memref<1x128xf32, #tpu.memory_space<vmem>>, %arg5: memref<8x128xf32, #tpu.memory_space<vmem>>) attributes {dimension_semantics = [#tpu.dimension_semantics<parallel>], iteration_bounds = array<i64: 1>, scalar_prefetch = 0 : i64, scratch_operands = 0 : i64, tpu.core_type = #tpu.core_type<tc>, window_params = [{transform_indices = @transform_0, window_bounds = array<i64: 4, 73, 1024>}, {pipeline_mode = #tpu.pipeline_mode<synchronous>, transform_indices = @transform_1, window_bounds = array<i64: 10, 73>}, {pipeline_mode = #tpu.pipeline_mode<synchronous>, transform_indices = @transform_2, window_bounds = array<i64: 10, 128, 128>}, {pipeline_mode = #tpu.pipeline_mode<synchronous>, transform_indices = @transform_3, window_bounds = array<i64: 1, 128>}, {transform_indices = @transform_4, window_bounds = array<i64: 8, 128>}]} {
    %c0 = arith.constant 0 : index
    %c0_0 = arith.constant 0 : index
    %0 = vector.load %arg2[%c0, %c0_0] : memref<10x73xbf16, #tpu.memory_space<vmem>>, vector<10x73xbf16>
    %c0_1 = arith.constant 0 : index
    %c0_2 = arith.constant 0 : index
    %c0_3 = arith.constant 0 : index
    %1 = vector.load %arg1[%c0_1, %c0_2, %c0_3] : memref<4x73x1024xbf16, #tpu.memory_space<vmem>>, vector<1x73x1024xbf16>
    %2 = vector.shape_cast %1 : vector<1x73x1024xbf16> to vector<73x1024xbf16>
    %cst = arith.constant dense<0.000000e+00> : vector<10x1024xf32>
    %3 = tpu.matmul %0, %2, %cst {dimension_numbers = #tpu.dot_dimension_numbers<[1], [0], [0], [1], [0, 0, 1, 1], [], []>} : vector<10x73xbf16>, vector<73x1024xbf16>, vector<10x1024xf32> -> vector<10x1024xf32>
    %c1 = arith.constant 1 : index
    %c0_4 = arith.constant 0 : index
    %c0_5 = arith.constant 0 : index
    %4 = vector.load %arg1[%c1, %c0_4, %c0_5] : memref<4x73x1024xbf16, #tpu.memory_space<vmem>>, vector<1x73x1024xbf16>
    %5 = vector.shape_cast %4 : vector<1x73x1024xbf16> to vector<73x1024xbf16>
    %cst_6 = arith.constant dense<0.000000e+00> : vector<10x1024xf32>
    %6 = tpu.matmul %0, %5, %cst_6 {dimension_numbers = #tpu.dot_dimension_numbers<[1], [0], [0], [1], [0, 0, 1, 1], [], []>} : vector<10x73xbf16>, vector<73x1024xbf16>, vector<10x1024xf32> -> vector<10x1024xf32>
    %c2 = arith.constant 2 : index
    %c0_7 = arith.constant 0 : index
    %c0_8 = arith.constant 0 : index
    %7 = vector.load %arg1[%c2, %c0_7, %c0_8] : memref<4x73x1024xbf16, #tpu.memory_space<vmem>>, vector<1x73x1024xbf16>
    %8 = vector.shape_cast %7 : vector<1x73x1024xbf16> to vector<73x1024xbf16>
    %cst_9 = arith.constant dense<0.000000e+00> : vector<10x1024xf32>
    %9 = tpu.matmul %0, %8, %cst_9 {dimension_numbers = #tpu.dot_dimension_numbers<[1], [0], [0], [1], [0, 0, 1, 1], [], []>} : vector<10x73xbf16>, vector<73x1024xbf16>, vector<10x1024xf32> -> vector<10x1024xf32>
    %c3 = arith.constant 3 : index
    %c0_10 = arith.constant 0 : index
    %c0_11 = arith.constant 0 : index
    %10 = vector.load %arg1[%c3, %c0_10, %c0_11] : memref<4x73x1024xbf16, #tpu.memory_space<vmem>>, vector<1x73x1024xbf16>
    %11 = vector.shape_cast %10 : vector<1x73x1024xbf16> to vector<73x1024xbf16>
    %cst_12 = arith.constant dense<0.000000e+00> : vector<10x1024xf32>
    %12 = tpu.matmul %0, %11, %cst_12 {dimension_numbers = #tpu.dot_dimension_numbers<[1], [0], [0], [1], [0, 0, 1, 1], [], []>} : vector<10x73xbf16>, vector<73x1024xbf16>, vector<10x1024xf32> -> vector<10x1024xf32>
    %13 = arith.maximumf %3, %6 : vector<10x1024xf32>
    %14 = arith.maximumf %9, %12 : vector<10x1024xf32>
    %15 = arith.maximumf %13, %14 : vector<10x1024xf32>
    %cst_13 = arith.constant 0.000000e+00 : f32
    %16 = vector.broadcast %cst_13 : f32 to vector<10x1024xf32>
    %17 = arith.maximumf %15, %16 : vector<10x1024xf32>
    %18 = vector.shape_cast %17 : vector<10x1024xf32> to vector<80x128xf32>
    %cst_14 = arith.constant 0.000000e+00 : f32
    %19 = vector.broadcast %cst_14 : f32 to vector<8x128xf32>
    %20 = vector.extract_strided_slice %18 {offsets = [0, 0], sizes = [8, 128], strides = [1, 1]} : vector<80x128xf32> to vector<8x128xf32>
    %c0_15 = arith.constant 0 : index
    %c0_16 = arith.constant 0 : index
    %c0_17 = arith.constant 0 : index
    %21 = vector.load %arg3[%c0_15, %c0_16, %c0_17] : memref<10x128x128xf32, #tpu.memory_space<vmem>>, vector<1x128x128xf32>
    %22 = vector.shape_cast %21 : vector<1x128x128xf32> to vector<128x128xf32>
    %cst_18 = arith.constant dense<0.000000e+00> : vector<8x128xf32>
    %23 = tpu.matmul %20, %22, %cst_18 {dimension_numbers = #tpu.dot_dimension_numbers<[1], [0], [0], [1], [0, 0, 1, 1], [], []>} : vector<8x128xf32>, vector<128x128xf32>, vector<8x128xf32> -> vector<8x128xf32>
    %24 = arith.addf %19, %23 : vector<8x128xf32>
    %25 = vector.extract_strided_slice %18 {offsets = [8, 0], sizes = [8, 128], strides = [1, 1]} : vector<80x128xf32> to vector<8x128xf32>
    %c1_19 = arith.constant 1 : index
    %c0_20 = arith.constant 0 : index
    %c0_21 = arith.constant 0 : index
    %26 = vector.load %arg3[%c1_19, %c0_20, %c0_21] : memref<10x128x128xf32, #tpu.memory_space<vmem>>, vector<1x128x128xf32>
    %27 = vector.shape_cast %26 : vector<1x128x128xf32> to vector<128x128xf32>
    %cst_22 = arith.constant dense<0.000000e+00> : vector<8x128xf32>
    %28 = tpu.matmul %25, %27, %cst_22 {dimension_numbers = #tpu.dot_dimension_numbers<[1], [0], [0], [1], [0, 0, 1, 1], [], []>} : vector<8x128xf32>, vector<128x128xf32>, vector<8x128xf32> -> vector<8x128xf32>
    %29 = arith.addf %24, %28 : vector<8x128xf32>
    %30 = vector.extract_strided_slice %18 {offsets = [16, 0], sizes = [8, 128], strides = [1, 1]} : vector<80x128xf32> to vector<8x128xf32>
    %c2_23 = arith.constant 2 : index
    %c0_24 = arith.constant 0 : index
    %c0_25 = arith.constant 0 : index
    %31 = vector.load %arg3[%c2_23, %c0_24, %c0_25] : memref<10x128x128xf32, #tpu.memory_space<vmem>>, vector<1x128x128xf32>
    %32 = vector.shape_cast %31 : vector<1x128x128xf32> to vector<128x128xf32>
    %cst_26 = arith.constant dense<0.000000e+00> : vector<8x128xf32>
    %33 = tpu.matmul %30, %32, %cst_26 {dimension_numbers = #tpu.dot_dimension_numbers<[1], [0], [0], [1], [0, 0, 1, 1], [], []>} : vector<8x128xf32>, vector<128x128xf32>, vector<8x128xf32> -> vector<8x128xf32>
    %34 = arith.addf %29, %33 : vector<8x128xf32>
    %35 = vector.extract_strided_slice %18 {offsets = [24, 0], sizes = [8, 128], strides = [1, 1]} : vector<80x128xf32> to vector<8x128xf32>
    %c3_27 = arith.constant 3 : index
    %c0_28 = arith.constant 0 : index
    %c0_29 = arith.constant 0 : index
    %36 = vector.load %arg3[%c3_27, %c0_28, %c0_29] : memref<10x128x128xf32, #tpu.memory_space<vmem>>, vector<1x128x128xf32>
    %37 = vector.shape_cast %36 : vector<1x128x128xf32> to vector<128x128xf32>
    %cst_30 = arith.constant dense<0.000000e+00> : vector<8x128xf32>
    %38 = tpu.matmul %35, %37, %cst_30 {dimension_numbers = #tpu.dot_dimension_numbers<[1], [0], [0], [1], [0, 0, 1, 1], [], []>} : vector<8x128xf32>, vector<128x128xf32>, vector<8x128xf32> -> vector<8x128xf32>
    %39 = arith.addf %34, %38 : vector<8x128xf32>
    %40 = vector.extract_strided_slice %18 {offsets = [32, 0], sizes = [8, 128], strides = [1, 1]} : vector<80x128xf32> to vector<8x128xf32>
    %c4 = arith.constant 4 : index
    %c0_31 = arith.constant 0 : index
    %c0_32 = arith.constant 0 : index
    %41 = vector.load %arg3[%c4, %c0_31, %c0_32] : memref<10x128x128xf32, #tpu.memory_space<vmem>>, vector<1x128x128xf32>
    %42 = vector.shape_cast %41 : vector<1x128x128xf32> to vector<128x128xf32>
    %cst_33 = arith.constant dense<0.000000e+00> : vector<8x128xf32>
    %43 = tpu.matmul %40, %42, %cst_33 {dimension_numbers = #tpu.dot_dimension_numbers<[1], [0], [0], [1], [0, 0, 1, 1], [], []>} : vector<8x128xf32>, vector<128x128xf32>, vector<8x128xf32> -> vector<8x128xf32>
    %44 = arith.addf %39, %43 : vector<8x128xf32>
    %45 = vector.extract_strided_slice %18 {offsets = [40, 0], sizes = [8, 128], strides = [1, 1]} : vector<80x128xf32> to vector<8x128xf32>
    %c5 = arith.constant 5 : index
    %c0_34 = arith.constant 0 : index
    %c0_35 = arith.constant 0 : index
    %46 = vector.load %arg3[%c5, %c0_34, %c0_35] : memref<10x128x128xf32, #tpu.memory_space<vmem>>, vector<1x128x128xf32>
    %47 = vector.shape_cast %46 : vector<1x128x128xf32> to vector<128x128xf32>
    %cst_36 = arith.constant dense<0.000000e+00> : vector<8x128xf32>
    %48 = tpu.matmul %45, %47, %cst_36 {dimension_numbers = #tpu.dot_dimension_numbers<[1], [0], [0], [1], [0, 0, 1, 1], [], []>} : vector<8x128xf32>, vector<128x128xf32>, vector<8x128xf32> -> vector<8x128xf32>
    %49 = arith.addf %44, %48 : vector<8x128xf32>
    %50 = vector.extract_strided_slice %18 {offsets = [48, 0], sizes = [8, 128], strides = [1, 1]} : vector<80x128xf32> to vector<8x128xf32>
    %c6 = arith.constant 6 : index
    %c0_37 = arith.constant 0 : index
    %c0_38 = arith.constant 0 : index
    %51 = vector.load %arg3[%c6, %c0_37, %c0_38] : memref<10x128x128xf32, #tpu.memory_space<vmem>>, vector<1x128x128xf32>
    %52 = vector.shape_cast %51 : vector<1x128x128xf32> to vector<128x128xf32>
    %cst_39 = arith.constant dense<0.000000e+00> : vector<8x128xf32>
    %53 = tpu.matmul %50, %52, %cst_39 {dimension_numbers = #tpu.dot_dimension_numbers<[1], [0], [0], [1], [0, 0, 1, 1], [], []>} : vector<8x128xf32>, vector<128x128xf32>, vector<8x128xf32> -> vector<8x128xf32>
    %54 = arith.addf %49, %53 : vector<8x128xf32>
    %55 = vector.extract_strided_slice %18 {offsets = [56, 0], sizes = [8, 128], strides = [1, 1]} : vector<80x128xf32> to vector<8x128xf32>
    %c7 = arith.constant 7 : index
    %c0_40 = arith.constant 0 : index
    %c0_41 = arith.constant 0 : index
    %56 = vector.load %arg3[%c7, %c0_40, %c0_41] : memref<10x128x128xf32, #tpu.memory_space<vmem>>, vector<1x128x128xf32>
    %57 = vector.shape_cast %56 : vector<1x128x128xf32> to vector<128x128xf32>
    %cst_42 = arith.constant dense<0.000000e+00> : vector<8x128xf32>
    %58 = tpu.matmul %55, %57, %cst_42 {dimension_numbers = #tpu.dot_dimension_numbers<[1], [0], [0], [1], [0, 0, 1, 1], [], []>} : vector<8x128xf32>, vector<128x128xf32>, vector<8x128xf32> -> vector<8x128xf32>
    %59 = arith.addf %54, %58 : vector<8x128xf32>
    %60 = vector.extract_strided_slice %18 {offsets = [64, 0], sizes = [8, 128], strides = [1, 1]} : vector<80x128xf32> to vector<8x128xf32>
    %c8 = arith.constant 8 : index
    %c0_43 = arith.constant 0 : index
    %c0_44 = arith.constant 0 : index
    %61 = vector.load %arg3[%c8, %c0_43, %c0_44] : memref<10x128x128xf32, #tpu.memory_space<vmem>>, vector<1x128x128xf32>
    %62 = vector.shape_cast %61 : vector<1x128x128xf32> to vector<128x128xf32>
    %cst_45 = arith.constant dense<0.000000e+00> : vector<8x128xf32>
    %63 = tpu.matmul %60, %62, %cst_45 {dimension_numbers = #tpu.dot_dimension_numbers<[1], [0], [0], [1], [0, 0, 1, 1], [], []>} : vector<8x128xf32>, vector<128x128xf32>, vector<8x128xf32> -> vector<8x128xf32>
    %64 = arith.addf %59, %63 : vector<8x128xf32>
    %65 = vector.extract_strided_slice %18 {offsets = [72, 0], sizes = [8, 128], strides = [1, 1]} : vector<80x128xf32> to vector<8x128xf32>
    %c9 = arith.constant 9 : index
    %c0_46 = arith.constant 0 : index
    %c0_47 = arith.constant 0 : index
    %66 = vector.load %arg3[%c9, %c0_46, %c0_47] : memref<10x128x128xf32, #tpu.memory_space<vmem>>, vector<1x128x128xf32>
    %67 = vector.shape_cast %66 : vector<1x128x128xf32> to vector<128x128xf32>
    %cst_48 = arith.constant dense<0.000000e+00> : vector<8x128xf32>
    %68 = tpu.matmul %65, %67, %cst_48 {dimension_numbers = #tpu.dot_dimension_numbers<[1], [0], [0], [1], [0, 0, 1, 1], [], []>} : vector<8x128xf32>, vector<128x128xf32>, vector<8x128xf32> -> vector<8x128xf32>
    %69 = arith.addf %64, %68 : vector<8x128xf32>
    %c0_49 = arith.constant 0 : index
    %c0_50 = arith.constant 0 : index
    %70 = vector.load %arg4[%c0_49, %c0_50] : memref<1x128xf32, #tpu.memory_space<vmem>>, vector<1x128xf32>
    %71 = vector.broadcast %70 : vector<1x128xf32> to vector<8x128xf32>
    %72 = arith.addf %69, %71 : vector<8x128xf32>
    %cst_51 = arith.constant 0.000000e+00 : f32
    %73 = vector.broadcast %cst_51 : f32 to vector<8x128xf32>
    %74 = arith.maximumf %72, %73 : vector<8x128xf32>
    %c0_52 = arith.constant 0 : index
    %c0_53 = arith.constant 0 : index
    %75 = vector.load %arg5[%c0_52, %c0_53] : memref<8x128xf32, #tpu.memory_space<vmem>>, vector<8x128xf32>
    tpu.vector_store %arg5[%c0_52, %c0_53], %74 {strides = array<i32>} : memref<8x128xf32, #tpu.memory_space<vmem>>, vector<8x128xf32>,
    return
  }
  func.func @transform_0(%arg0: i32) -> (i32, i32, i32) {
    %c0_i32 = arith.constant 0 : i32
    %c0_i32_0 = arith.constant 0 : i32
    %c0_i32_1 = arith.constant 0 : i32
    return %c0_i32, %c0_i32_0, %arg0 : i32, i32, i32
  }
  func.func @transform_1(%arg0: i32) -> (i32, i32) {
    %c0_i32 = arith.constant 0 : i32
    %c0_i32_0 = arith.constant 0 : i32
    %c0_i32_1 = arith.constant 0 : i32
    return %c0_i32, %c0_i32_0 : i32, i32
  }
  func.func @transform_2(%arg0: i32) -> (i32, i32, i32) {
    %c0_i32 = arith.constant 0 : i32
    %c0_i32_0 = arith.constant 0 : i32
    %c0_i32_1 = arith.constant 0 : i32
    %c0_i32_2 = arith.constant 0 : i32
    return %c0_i32, %c0_i32_0, %c0_i32_1 : i32, i32, i32
  }
  func.func @transform_3(%arg0: i32) -> (i32, i32) {
    %c0_i32 = arith.constant 0 : i32
    %c0_i32_0 = arith.constant 0 : i32
    %c0_i32_1 = arith.constant 0 : i32
    return %c0_i32, %c0_i32_0 : i32, i32
  }
  func.func @transform_4(%arg0: i32) -> (i32, i32) {
    %c0_i32 = arith.constant 0 : i32
    %c0_i32_0 = arith.constant 0 : i32
    return %arg0, %c0_i32 : i32, i32
  }
}

</mosaic_0001>

<llo_original>
// kernel: tpu_custom_call.1
$region0: #{tpu_custom_call.1}
  #allocation0 [shape = 'u32[]', space=smem, size = 0x4, offset = 0x4, fixed_abs, tag = 'smem constant byte address 0x4 - core index']
  #allocation1 [shape = 'u32[72,128]{1,0:T(1,128)}', space=vmem, size = 0x9000, scoped, tag = 'internal scratch']
  %s0 = inlined_call_operand.vmem [shape: bf16[4,73,1024], index: 0, kind: input, shape index: {}]
  %s1 = inlined_call_operand.vmem [shape: bf16[10,73], index: 1, kind: input, shape index: {}]
  %s2 = inlined_call_operand.vmem [shape: f32[10,128,128], index: 2, kind: input, shape index: {}]
  %s3 = inlined_call_operand.vmem [shape: f32[1,128], index: 3, kind: input, shape index: {}]
  %s4 = inlined_call_operand.hbm [shape: f32[8,128], index: 4, kind: output, shape index: {}]
  %s5 = sld [smem:[#allocation0]]
  $region26: #{tpu_custom_call.1} parent=0
    _
  %s7 = ssub.s32 1, %s5
  %s8 = scalar_select 0, %s7, %s5
  $region1: #{tpu_custom_call.1} parent=0
    #allocation2 [shape = 'u8[4096]{0}', space=vmem, size = 0x1000, scoped, tag = 'output window, operand 0, single buffered']
    #allocation3 [shape = 's32[1]{0}', space=sflag, size = 0x4, scoped, tag = 'scoped memory for tpu_custom_call.1']
    %9 = vsyncpa [#allocation3], 0
    // Predicated region
    $region2: #{tpu_custom_call.1} parent=1 // pred_check
      _
    $region3: #{tpu_custom_call.1} parent=1 // pred_check_branch
      %11 = sbr.rel (0) target = $region5
    $region4: #{tpu_custom_call.1} parent=1 // pred_region
      _
    $region5: #{tpu_custom_call.1} parent=1 // pred_fallthru
      _
    // Predicated region
    $region6: #{tpu_custom_call.1} parent=1 // pred_check
      _
    $region7: #{tpu_custom_call.1} parent=1 // pred_check_branch
      %13 = sbr.rel (0) target = $region9
    $region8: #{tpu_custom_call.1} parent=1 // pred_region
      _
    $region9: #{tpu_custom_call.1} parent=1 // pred_fallthru
      _
    // Predicated region
    $region10: #{tpu_custom_call.1} parent=1 // pred_check
      _
    $region11: #{tpu_custom_call.1} parent=1 // pred_check_branch
      %15 = sbr.rel (0) target = $region13
    $region12: #{tpu_custom_call.1} parent=1 // pred_region
      _
    $region13: #{tpu_custom_call.1} parent=1 // pred_fallthru
      _
    // Predicated region
    $region14: #{tpu_custom_call.1} parent=1 // pred_check
      _
    $region15: #{tpu_custom_call.1} parent=1 // pred_check_branch
      %17 = sbr.rel (0) target = $region17
    $region16: #{tpu_custom_call.1} parent=1 // pred_region
      _
    $region17: #{tpu_custom_call.1} parent=1 // pred_fallthru
      _
    %v19 = vld [vmem:[%s1] sm:$0xf]
    %v20 = vld [vmem:[%s1 + $0x4] sm:$0x1]
    %v21 = vld [vmem:[%s0] sm:$0xff]
    %v22 = vld [vmem:[%s0 + $0x8] sm:$0xff]
    %v23 = vld [vmem:[%s0 + $0x10] sm:$0xff]
    %v24 = vld [vmem:[%s0 + $0x18] sm:$0xff]
    %v25 = vld [vmem:[%s0 + $0x20] sm:$0xff]
    %v26 = vld [vmem:[%s0 + $0x28] sm:$0xff]
    %v27 = vld [vmem:[%s0 + $0x30] sm:$0xff]
    %v28 = vld [vmem:[%s0 + $0x38] sm:$0xff]
    %v29 = vld [vmem:[%s0 + $0x40] sm:$0xff]
    %v30 = vld [vmem:[%s0 + $0x48] sm:$0xff]
    %v31 = vld [vmem:[%s0 + $0x50] sm:$0xff]
    %v32 = vld [vmem:[%s0 + $0x58] sm:$0xff]
    %v33 = vld [vmem:[%s0 + $0x60] sm:$0xff]
    %v34 = vld [vmem:[%s0 + $0x68] sm:$0xff]
    %v35 = vld [vmem:[%s0 + $0x70] sm:$0xff]
    %v36 = vld [vmem:[%s0 + $0x78] sm:$0xff]
    %v37 = vld [vmem:[%s0 + $0x80] sm:$0xff]
    %v38 = vld [vmem:[%s0 + $0x88] sm:$0xff]
    %v39 = vld [vmem:[%s0 + $0x90] sm:$0xff]
    %v40 = vld [vmem:[%s0 + $0x98] sm:$0xff]
    %v41 = vld [vmem:[%s0 + $0xa0] sm:$0xff]
    %v42 = vld [vmem:[%s0 + $0xa8] sm:$0xff]
    %v43 = vld [vmem:[%s0 + $0xb0] sm:$0xff]
    %v44 = vld [vmem:[%s0 + $0xb8] sm:$0xff]
    %v45 = vld [vmem:[%s0 + $0xc0] sm:$0xff]
    %v46 = vld [vmem:[%s0 + $0xc8] sm:$0xff]
    %v47 = vld [vmem:[%s0 + $0xd0] sm:$0xff]
    %v48 = vld [vmem:[%s0 + $0xd8] sm:$0xff]
    %v49 = vld [vmem:[%s0 + $0xe0] sm:$0xff]
    %v50 = vld [vmem:[%s0 + $0xe8] sm:$0xff]
    %v51 = vld [vmem:[%s0 + $0xf0] sm:$0xff]
    %v52 = vld [vmem:[%s0 + $0xf8] sm:$0xff]
    %v53 = vld [vmem:[%s0 + $0x100] sm:$0xff]
    %v54 = vld [vmem:[%s0 + $0x108] sm:$0xff]
    %v55 = vld [vmem:[%s0 + $0x110] sm:$0xff]
    %v56 = vld [vmem:[%s0 + $0x118] sm:$0xff]
    %v57 = vld [vmem:[%s0 + $0x120] sm:$0x11]
    %v58 = vld [vmem:[%s0 + $0x128] sm:$0x11]
    %v59 = vld [vmem:[%s0 + $0x130] sm:$0x11]
    %v60 = vld [vmem:[%s0 + $0x138] sm:$0x11]
    %v63 = vunpack.c.l.b16 %v19
    %v64 = vunpack.c.l.b16 %v20
    %v65 = vpack.c.b16 %v64, %v63
    %v106 = vunpack.c.l.b16 %v21
    %v107 = vunpack.c.h.b16 %v21
    %v108 = vunpack.c.l.b16 %v22
    %v109 = vunpack.c.h.b16 %v22
    %v110 = vunpack.c.l.b16 %v23
    %v111 = vunpack.c.h.b16 %v23
    %v112 = vunpack.c.l.b16 %v24
    %v113 = vunpack.c.h.b16 %v24
    %v114 = vunpack.c.l.b16 %v25
    %v115 = vunpack.c.h.b16 %v25
    %v116 = vunpack.c.l.b16 %v26
    %v117 = vunpack.c.h.b16 %v26
    %v118 = vunpack.c.l.b16 %v27
    %v119 = vunpack.c.h.b16 %v27
    %v120 = vunpack.c.l.b16 %v28
    %v121 = vunpack.c.h.b16 %v28
    %v122 = vunpack.c.l.b16 %v29
    %v123 = vunpack.c.h.b16 %v29
    %v124 = vunpack.c.l.b16 %v30
    %v125 = vunpack.c.h.b16 %v30
    %v126 = vunpack.c.l.b16 %v31
    %v127 = vunpack.c.h.b16 %v31
    %v128 = vunpack.c.l.b16 %v32
    %v129 = vunpack.c.h.b16 %v32
    %v130 = vunpack.c.l.b16 %v33
    %v131 = vunpack.c.h.b16 %v33
    %v132 = vunpack.c.l.b16 %v34
    %v133 = vunpack.c.h.b16 %v34
    %v134 = vunpack.c.l.b16 %v35
    %v135 = vunpack.c.h.b16 %v35
    %v136 = vunpack.c.l.b16 %v36
    %v137 = vunpack.c.h.b16 %v36
    %v138 = vunpack.c.l.b16 %v37
    %v139 = vunpack.c.h.b16 %v37
    %v140 = vunpack.c.l.b16 %v38
    %v141 = vunpack.c.h.b16 %v38
    %v142 = vunpack.c.l.b16 %v39
    %v143 = vunpack.c.h.b16 %v39
    %v144 = vunpack.c.l.b16 %v40
    %v145 = vunpack.c.h.b16 %v40
    %v146 = vunpack.c.l.b16 %v41
    %v147 = vunpack.c.h.b16 %v41
    %v148 = vunpack.c.l.b16 %v42
    %v149 = vunpack.c.h.b16 %v42
    %v150 = vunpack.c.l.b16 %v43
    %v151 = vunpack.c.h.b16 %v43
    %v152 = vunpack.c.l.b16 %v44
    %v153 = vunpack.c.h.b16 %v44
    %v154 = vunpack.c.l.b16 %v45
    %v155 = vunpack.c.h.b16 %v45
    %v156 = vunpack.c.l.b16 %v46
    %v157 = vunpack.c.h.b16 %v46
    %v158 = vunpack.c.l.b16 %v47
    %v159 = vunpack.c.h.b16 %v47
    %v160 = vunpack.c.l.b16 %v48
    %v161 = vunpack.c.h.b16 %v48
    %v162 = vunpack.c.l.b16 %v49
    %v163 = vunpack.c.h.b16 %v49
    %v164 = vunpack.c.l.b16 %v50
    %v165 = vunpack.c.h.b16 %v50
    %v166 = vunpack.c.l.b16 %v51
    %v167 = vunpack.c.h.b16 %v51
    %v168 = vunpack.c.l.b16 %v52
    %v169 = vunpack.c.h.b16 %v52
    %v170 = vunpack.c.l.b16 %v53
    %v171 = vunpack.c.h.b16 %v53
    %v172 = vunpack.c.l.b16 %v54
    %v173 = vunpack.c.h.b16 %v54
    %v174 = vunpack.c.l.b16 %v55
    %v175 = vunpack.c.h.b16 %v55
    %v176 = vunpack.c.l.b16 %v56
    %v177 = vunpack.c.h.b16 %v56
    %v178 = vunpack.c.l.b16 %v57
    %v179 = vunpack.c.h.b16 %v57
    %v180 = vunpack.c.l.b16 %v58
    %v181 = vunpack.c.h.b16 %v58
    %v182 = vunpack.c.l.b16 %v59
    %v183 = vunpack.c.h.b16 %v59
    %v184 = vunpack.c.l.b16 %v60
    %v185 = vunpack.c.h.b16 %v60
    %v186 = vpack.c.b16 %v114, %v106
    %v187 = vpack.c.b16 %v115, %v107
    %v188 = vpack.c.b16 %v116, %v108
    %v189 = vpack.c.b16 %v117, %v109
    %v190 = vpack.c.b16 %v118, %v110
    %v191 = vpack.c.b16 %v119, %v111
    %v192 = vpack.c.b16 %v120, %v112
    %v193 = vpack.c.b16 %v121, %v113
    %v194 = vpack.c.b16 %v130, %v122
    %v195 = vpack.c.b16 %v131, %v123
    %v196 = vpack.c.b16 %v132, %v124
    %v197 = vpack.c.b16 %v133, %v125
    %v198 = vpack.c.b16 %v134, %v126
    %v199 = vpack.c.b16 %v135, %v127
    %v200 = vpack.c.b16 %v136, %v128
    %v201 = vpack.c.b16 %v137, %v129
    %v202 = vpack.c.b16 %v146, %v138
    %v203 = vpack.c.b16 %v147, %v139
    %v204 = vpack.c.b16 %v148, %v140
    %v205 = vpack.c.b16 %v149, %v141
    %v206 = vpack.c.b16 %v150, %v142
    %v207 = vpack.c.b16 %v151, %v143
    %v208 = vpack.c.b16 %v152, %v144
    %v209 = vpack.c.b16 %v153, %v145
    %v210 = vpack.c.b16 %v162, %v154
    %v211 = vpack.c.b16 %v163, %v155
    %v212 = vpack.c.b16 %v164, %v156
    %v213 = vpack.c.b16 %v165, %v157
    %v214 = vpack.c.b16 %v166, %v158
    %v215 = vpack.c.b16 %v167, %v159
    %v216 = vpack.c.b16 %v168, %v160
    %v217 = vpack.c.b16 %v169, %v161
    %v218 = vpack.c.b16 %v178, %v170
    %v219 = vpack.c.b16 %v179, %v171
    %v220 = vpack.c.b16 %v180, %v172
    %v221 = vpack.c.b16 %v181, %v173
    %v222 = vpack.c.b16 %v182, %v174
    %v223 = vpack.c.b16 %v183, %v175
    %v224 = vpack.c.b16 %v184, %v176
    %v225 = vpack.c.b16 %v185, %v177
    %vm258 = vcmask 596992
    %v260 = vsel %vm258, %v65, 0
    %vm262 = vcmask 1043456
    %vm263 = vcmask 1044480
    %v264 = vsel %vm262, 4294967295, 65535
    %v265 = vsel %vm263, %v264, 0
    %v267 = vand.u32 %v218, %v265
    %v270 = vand.u32 %v219, %v265
    %v273 = vand.u32 %v220, %v265
    %v276 = vand.u32 %v221, %v265
    %v279 = vand.u32 %v222, %v265
    %v282 = vand.u32 %v223, %v265
    %v285 = vand.u32 %v224, %v265
    %v288 = vand.u32 %v225, %v265
    %290 = vmatpush.bf16.msra.mxu0 0
    %291 = vmatpush.bf16.msra.mxu0 0
    %292 = vmatpush.bf16.msra.mxu0 0
    %293 = vmatpush.bf16.msra.mxu0 %v267
    %294 = vmatpush.bf16.msra.mxu0 %v210
    %295 = vmatpush.bf16.msra.mxu0 %v202
    %296 = vmatpush.bf16.msra.mxu0 %v194
    %297 = vmatpush.bf16.msra.mxu0 %v186
    %298 = vmatmul.bf16.gmra.mxu0 %v260
    %v299 = vpop.f32.mrf.mxu0
    %v300 = vadd.f32 0.0, %v299
    %v301 = vpop.f32.mrf.mxu0
    %v302 = vadd.f32 0.0, %v301
    %303 = vdwg.mxu0
    %304 = vmatpush.bf16.msra.mxu0 0
    %305 = vmatpush.bf16.msra.mxu0 0
    %306 = vmatpush.bf16.msra.mxu0 0
    %307 = vmatpush.bf16.msra.mxu0 %v270
    %308 = vmatpush.bf16.msra.mxu0 %v211
    %309 = vmatpush.bf16.msra.mxu0 %v203
    %310 = vmatpush.bf16.msra.mxu0 %v195
    %311 = vmatpush.bf16.msra.mxu0 %v187
    %312 = vmatmul.bf16.gmra.mxu0 %v260
    %v313 = vpop.f32.mrf.mxu0
    %v314 = vadd.f32 0.0, %v313
    %v315 = vpop.f32.mrf.mxu0
    %v316 = vadd.f32 0.0, %v315
    %317 = vdwg.mxu0
    %318 = vmatpush.bf16.msra.mxu0 0
    %319 = vmatpush.bf16.msra.mxu0 0
    %320 = vmatpush.bf16.msra.mxu0 0
    %321 = vmatpush.bf16.msra.mxu0 %v273
    %322 = vmatpush.bf16.msra.mxu0 %v212
    %323 = vmatpush.bf16.msra.mxu0 %v204
    %324 = vmatpush.bf16.msra.mxu0 %v196
    %325 = vmatpush.bf16.msra.mxu0 %v188
    %326 = vmatmul.bf16.gmra.mxu0 %v260
    %v327 = vpop.f32.mrf.mxu0
    %v328 = vadd.f32 0.0, %v327
    %v329 = vpop.f32.mrf.mxu0
    %v330 = vadd.f32 0.0, %v329
    %331 = vdwg.mxu0
    %332 = vmatpush.bf16.msra.mxu0 0
    %333 = vmatpush.bf16.msra.mxu0 0
    %334 = vmatpush.bf16.msra.mxu0 0
    %335 = vmatpush.bf16.msra.mxu0 %v276
    %336 = vmatpush.bf16.msra.mxu0 %v213
    %337 = vmatpush.bf16.msra.mxu0 %v205
    %338 = vmatpush.bf16.msra.mxu0 %v197
    %339 = vmatpush.bf16.msra.mxu0 %v189
    %340 = vmatmul.bf16.gmra.mxu0 %v260
    %v341 = vpop.f32.mrf.mxu0
    %v342 = vadd.f32 0.0, %v341
    %v343 = vpop.f32.mrf.mxu0
    %v344 = vadd.f32 0.0, %v343
    %345 = vdwg.mxu0
    %346 = vmatpush.bf16.msra.mxu0 0
    %347 = vmatpush.bf16.msra.mxu0 0
    %348 = vmatpush.bf16.msra.mxu0 0
    %349 = vmatpush.bf16.msra.mxu0 %v279
    %350 = vmatpush.bf16.msra.mxu0 %v214
    %351 = vmatpush.bf16.msra.mxu0 %v206
    %352 = vmatpush.bf16.msra.mxu0 %v198
    %353 = vmatpush.bf16.msra.mxu0 %v190
    %354 = vmatmul.bf16.gmra.mxu0 %v260
    %v355 = vpop.f32.mrf.mxu0
    %v356 = vadd.f32 0.0, %v355
    %v357 = vpop.f32.mrf.mxu0
    %v358 = vadd.f32 0.0, %v357
    %359 = vdwg.mxu0
    %360 = vmatpush.bf16.msra.mxu0 0
    %361 = vmatpush.bf16.msra.mxu0 0
    %362 = vmatpush.bf16.msra.mxu0 0
    %363 = vmatpush.bf16.msra.mxu0 %v282
    %364 = vmatpush.bf16.msra.mxu0 %v215
    %365 = vmatpush.bf16.msra.mxu0 %v207
    %366 = vmatpush.bf16.msra.mxu0 %v199
    %367 = vmatpush.bf16.msra.mxu0 %v191
    %368 = vmatmul.bf16.gmra.mxu0 %v260
    %v369 = vpop.f32.mrf.mxu0
    %v370 = vadd.f32 0.0, %v369
    %v371 = vpop.f32.mrf.mxu0
    %v372 = vadd.f32 0.0, %v371
    %373 = vdwg.mxu0
    %374 = vmatpush.bf16.msra.mxu0 0
    %375 = vmatpush.bf16.msra.mxu0 0
    %376 = vmatpush.bf16.msra.mxu0 0
    %377 = vmatpush.bf16.msra.mxu0 %v285
    %378 = vmatpush.bf16.msra.mxu0 %v216
    %379 = vmatpush.bf16.msra.mxu0 %v208
    %380 = vmatpush.bf16.msra.mxu0 %v200
    %381 = vmatpush.bf16.msra.mxu0 %v192
    %382 = vmatmul.bf16.gmra.mxu0 %v260
    %v383 = vpop.f32.mrf.mxu0
    %v384 = vadd.f32 0.0, %v383
    %v385 = vpop.f32.mrf.mxu0
    %v386 = vadd.f32 0.0, %v385
    %387 = vdwg.mxu0
    %388 = vmatpush.bf16.msra.mxu0 0
    %389 = vmatpush.bf16.msra.mxu0 0
    %390 = vmatpush.bf16.msra.mxu0 0
    %391 = vmatpush.bf16.msra.mxu0 %v288
    %392 = vmatpush.bf16.msra.mxu0 %v217
    %393 = vmatpush.bf16.msra.mxu0 %v209
    %394 = vmatpush.bf16.msra.mxu0 %v201
    %395 = vmatpush.bf16.msra.mxu0 %v193
    %396 = vmatmul.bf16.gmra.mxu0 %v260
    %v397 = vpop.f32.mrf.mxu0
    %v398 = vadd.f32 0.0, %v397
    %v399 = vpop.f32.mrf.mxu0
    %v400 = vadd.f32 0.0, %v399
    %401 = vdwg.mxu0
    %s402 = scalar_lea.vmem %s0, 320
    %v403 = vld [vmem:[%s402] sm:$0xff]
    %v404 = vld [vmem:[%s402 + $0x8] sm:$0xff]
    %v405 = vld [vmem:[%s402 + $0x10] sm:$0xff]
    %v406 = vld [vmem:[%s402 + $0x18] sm:$0xff]
    %v407 = vld [vmem:[%s402 + $0x20] sm:$0xff]
    %v408 = vld [vmem:[%s402 + $0x28] sm:$0xff]
    %v409 = vld [vmem:[%s402 + $0x30] sm:$0xff]
    %v410 = vld [vmem:[%s402 + $0x38] sm:$0xff]
    %v411 = vld [vmem:[%s402 + $0x40] sm:$0xff]
    %v412 = vld [vmem:[%s402 + $0x48] sm:$0xff]
    %v413 = vld [vmem:[%s402 + $0x50] sm:$0xff]
    %v414 = vld [vmem:[%s402 + $0x58] sm:$0xff]
    %v415 = vld [vmem:[%s402 + $0x60] sm:$0xff]
    %v416 = vld [vmem:[%s402 + $0x68] sm:$0xff]
    %v417 = vld [vmem:[%s402 + $0x70] sm:$0xff]
    %v418 = vld [vmem:[%s402 + $0x78] sm:$0xff]
    %v419 = vld [vmem:[%s402 + $0x80] sm:$0xff]
    %v420 = vld [vmem:[%s402 + $0x88] sm:$0xff]
    %v421 = vld [vmem:[%s402 + $0x90] sm:$0xff]
    %v422 = vld [vmem:[%s402 + $0x98] sm:$0xff]
    %v423 = vld [vmem:[%s402 + $0xa0] sm:$0xff]
    %v424 = vld [vmem:[%s402 + $0xa8] sm:$0xff]
    %v425 = vld [vmem:[%s402 + $0xb0] sm:$0xff]
    %v426 = vld [vmem:[%s402 + $0xb8] sm:$0xff]
    %v427 = vld [vmem:[%s402 + $0xc0] sm:$0xff]
    %v428 = vld [vmem:[%s402 + $0xc8] sm:$0xff]
    %v429 = vld [vmem:[%s402 + $0xd0] sm:$0xff]
    %v430 = vld [vmem:[%s402 + $0xd8] sm:$0xff]
    %v431 = vld [vmem:[%s402 + $0xe0] sm:$0xff]
    %v432 = vld [vmem:[%s402 + $0xe8] sm:$0xff]
    %v433 = vld [vmem:[%s402 + $0xf0] sm:$0xff]
    %v434 = vld [vmem:[%s402 + $0xf8] sm:$0xff]
    %v435 = vld [vmem:[%s402 + $0x100] sm:$0xff]
    %v436 = vld [vmem:[%s402 + $0x108] sm:$0xff]
    %v437 = vld [vmem:[%s402 + $0x110] sm:$0xff]
    %v438 = vld [vmem:[%s402 + $0x118] sm:$0xff]
    %v439 = vld [vmem:[%s402 + $0x120] sm:$0x11]
    %v440 = vld [vmem:[%s402 + $0x128] sm:$0x11]
    %v441 = vld [vmem:[%s402 + $0x130] sm:$0x11]
    %v442 = vld [vmem:[%s402 + $0x138] sm:$0x11]
    %v483 = vunpack.c.l.b16 %v403
    %v484 = vunpack.c.h.b16 %v403
    %v485 = vunpack.c.l.b16 %v404
    %v486 = vunpack.c.h.b16 %v404
    %v487 = vunpack.c.l.b16 %v405
    %v488 = vunpack.c.h.b16 %v405
    %v489 = vunpack.c.l.b16 %v406
    %v490 = vunpack.c.h.b16 %v406
    %v491 = vunpack.c.l.b16 %v407
    %v492 = vunpack.c.h.b16 %v407
    %v493 = vunpack.c.l.b16 %v408
    %v494 = vunpack.c.h.b16 %v408
    %v495 = vunpack.c.l.b16 %v409
    %v496 = vunpack.c.h.b16 %v409
    %v497 = vunpack.c.l.b16 %v410
    %v498 = vunpack.c.h.b16 %v410
    %v499 = vunpack.c.l.b16 %v411
    %v500 = vunpack.c.h.b16 %v411
    %v501 = vunpack.c.l.b16 %v412
    %v502 = vunpack.c.h.b16 %v412
    %v503 = vunpack.c.l.b16 %v413
    %v504 = vunpack.c.h.b16 %v413
    %v505 = vunpack.c.l.b16 %v414
    %v506 = vunpack.c.h.b16 %v414
    %v507 = vunpack.c.l.b16 %v415
    %v508 = vunpack.c.h.b16 %v415
    %v509 = vunpack.c.l.b16 %v416
    %v510 = vunpack.c.h.b16 %v416
    %v511 = vunpack.c.l.b16 %v417
    %v512 = vunpack.c.h.b16 %v417
    %v513 = vunpack.c.l.b16 %v418
    %v514 = vunpack.c.h.b16 %v418
    %v515 = vunpack.c.l.b16 %v419
    %v516 = vunpack.c.h.b16 %v419
    %v517 = vunpack.c.l.b16 %v420
    %v518 = vunpack.c.h.b16 %v420
    %v519 = vunpack.c.l.b16 %v421
    %v520 = vunpack.c.h.b16 %v421
    %v521 = vunpack.c.l.b16 %v422
    %v522 = vunpack.c.h.b16 %v422
    %v523 = vunpack.c.l.b16 %v423
    %v524 = vunpack.c.h.b16 %v423
    %v525 = vunpack.c.l.b16 %v424
    %v526 = vunpack.c.h.b16 %v424
    %v527 = vunpack.c.l.b16 %v425
    %v528 = vunpack.c.h.b16 %v425
    %v529 = vunpack.c.l.b16 %v426
    %v530 = vunpack.c.h.b16 %v426
    %v531 = vunpack.c.l.b16 %v427
    %v532 = vunpack.c.h.b16 %v427
    %v533 = vunpack.c.l.b16 %v428
    %v534 = vunpack.c.h.b16 %v428
    %v535 = vunpack.c.l.b16 %v429
    %v536 = vunpack.c.h.b16 %v429
    %v537 = vunpack.c.l.b16 %v430
    %v538 = vunpack.c.h.b16 %v430
    %v539 = vunpack.c.l.b16 %v431
    %v540 = vunpack.c.h.b16 %v431
    %v541 = vunpack.c.l.b16 %v432
    %v542 = vunpack.c.h.b16 %v432
    %v543 = vunpack.c.l.b16 %v433
    %v544 = vunpack.c.h.b16 %v433
    %v545 = vunpack.c.l.b16 %v434
    %v546 = vunpack.c.h.b16 %v434
    %v547 = vunpack.c.l.b16 %v435
    %v548 = vunpack.c.h.b16 %v435
    %v549 = vunpack.c.l.b16 %v436
    %v550 = vunpack.c.h.b16 %v436
    %v551 = vunpack.c.l.b16 %v437
    %v552 = vunpack.c.h.b16 %v437
    %v553 = vunpack.c.l.b16 %v438
    %v554 = vunpack.c.h.b16 %v438
    %v555 = vunpack.c.l.b16 %v439
    %v556 = vunpack.c.h.b16 %v439
    %v557 = vunpack.c.l.b16 %v440
    %v558 = vunpack.c.h.b16 %v440
    %v559 = vunpack.c.l.b16 %v441
    %v560 = vunpack.c.h.b16 %v441
    %v561 = vunpack.c.l.b16 %v442
    %v562 = vunpack.c.h.b16 %v442
    %v563 = vpack.c.b16 %v491, %v483
    %v564 = vpack.c.b16 %v492, %v484
    %v565 = vpack.c.b16 %v493, %v485
    %v566 = vpack.c.b16 %v494, %v486
    %v567 = vpack.c.b16 %v495, %v487
    %v568 = vpack.c.b16 %v496, %v488
    %v569 = vpack.c.b16 %v497, %v489
    %v570 = vpack.c.b16 %v498, %v490
    %v571 = vpack.c.b16 %v507, %v499
    %v572 = vpack.c.b16 %v508, %v500
    %v573 = vpack.c.b16 %v509, %v501
    %v574 = vpack.c.b16 %v510, %v502
    %v575 = vpack.c.b16 %v511, %v503
    %v576 = vpack.c.b16 %v512, %v504
    %v577 = vpack.c.b16 %v513, %v505
    %v578 = vpack.c.b16 %v514, %v506
    %v579 = vpack.c.b16 %v523, %v515
    %v580 = vpack.c.b16 %v524, %v516
    %v581 = vpack.c.b16 %v525, %v517
    %v582 = vpack.c.b16 %v526, %v518
    %v583 = vpack.c.b16 %v527, %v519
    %v584 = vpack.c.b16 %v528, %v520
    %v585 = vpack.c.b16 %v529, %v521
    %v586 = vpack.c.b16 %v530, %v522
    %v587 = vpack.c.b16 %v539, %v531
    %v588 = vpack.c.b16 %v540, %v532
    %v589 = vpack.c.b16 %v541, %v533
    %v590 = vpack.c.b16 %v542, %v534
    %v591 = vpack.c.b16 %v543, %v535
    %v592 = vpack.c.b16 %v544, %v536
    %v593 = vpack.c.b16 %v545, %v537
    %v594 = vpack.c.b16 %v546, %v538
    %v595 = vpack.c.b16 %v555, %v547
    %v596 = vpack.c.b16 %v556, %v548
    %v597 = vpack.c.b16 %v557, %v549
    %v598 = vpack.c.b16 %v558, %v550
    %v599 = vpack.c.b16 %v559, %v551
    %v600 = vpack.c.b16 %v560, %v552
    %v601 = vpack.c.b16 %v561, %v553
    %v602 = vpack.c.b16 %v562, %v554
    %v636 = vand.u32 %v595, %v265
    %v639 = vand.u32 %v596, %v265
    %v642 = vand.u32 %v597, %v265
    %v645 = vand.u32 %v598, %v265
    %v648 = vand.u32 %v599, %v265
    %v651 = vand.u32 %v600, %v265
    %v654 = vand.u32 %v601, %v265
    %v657 = vand.u32 %v602, %v265
    %659 = vmatpush.bf16.msra.mxu0 0
    %660 = vmatpush.bf16.msra.mxu0 0
    %661 = vmatpush.bf16.msra.mxu0 0
    %662 = vmatpush.bf16.msra.mxu0 %v636
    %663 = vmatpush.bf16.msra.mxu0 %v587
    %664 = vmatpush.bf16.msra.mxu0 %v579
    %665 = vmatpush.bf16.msra.mxu0 %v571
    %666 = vmatpush.bf16.msra.mxu0 %v563
    %667 = vmatmul.bf16.gmra.mxu0 %v260
    %v668 = vpop.f32.mrf.mxu0
    %v669 = vadd.f32 0.0, %v668
    %v670 = vpop.f32.mrf.mxu0
    %v671 = vadd.f32 0.0, %v670
    %672 = vdwg.mxu0
    %673 = vmatpush.bf16.msra.mxu0 0
    %674 = vmatpush.bf16.msra.mxu0 0
    %675 = vmatpush.bf16.msra.mxu0 0
    %676 = vmatpush.bf16.msra.mxu0 %v639
    %677 = vmatpush.bf16.msra.mxu0 %v588
    %678 = vmatpush.bf16.msra.mxu0 %v580
    %679 = vmatpush.bf16.msra.mxu0 %v572
    %680 = vmatpush.bf16.msra.mxu0 %v564
    %681 = vmatmul.bf16.gmra.mxu0 %v260
    %v682 = vpop.f32.mrf.mxu0
    %v683 = vadd.f32 0.0, %v682
    %v684 = vpop.f32.mrf.mxu0
    %v685 = vadd.f32 0.0, %v684
    %686 = vdwg.mxu0
    %687 = vmatpush.bf16.msra.mxu0 0
    %688 = vmatpush.bf16.msra.mxu0 0
    %689 = vmatpush.bf16.msra.mxu0 0
    %690 = vmatpush.bf16.msra.mxu0 %v642
    %691 = vmatpush.bf16.msra.mxu0 %v589
    %692 = vmatpush.bf16.msra.mxu0 %v581
    %693 = vmatpush.bf16.msra.mxu0 %v573
    %694 = vmatpush.bf16.msra.mxu0 %v565
    %695 = vmatmul.bf16.gmra.mxu0 %v260
    %v696 = vpop.f32.mrf.mxu0
    %v697 = vadd.f32 0.0, %v696
    %v698 = vpop.f32.mrf.mxu0
    %v699 = vadd.f32 0.0, %v698
    %700 = vdwg.mxu0
    %701 = vmatpush.bf16.msra.mxu0 0
    %702 = vmatpush.bf16.msra.mxu0 0
    %703 = vmatpush.bf16.msra.mxu0 0
    %704 = vmatpush.bf16.msra.mxu0 %v645
    %705 = vmatpush.bf16.msra.mxu0 %v590
    %706 = vmatpush.bf16.msra.mxu0 %v582
    %707 = vmatpush.bf16.msra.mxu0 %v574
    %708 = vmatpush.bf16.msra.mxu0 %v566
    %709 = vmatmul.bf16.gmra.mxu0 %v260
    %v710 = vpop.f32.mrf.mxu0
    %v711 = vadd.f32 0.0, %v710
    %v712 = vpop.f32.mrf.mxu0
    %v713 = vadd.f32 0.0, %v712
    %714 = vdwg.mxu0
    %715 = vmatpush.bf16.msra.mxu0 0
    %716 = vmatpush.bf16.msra.mxu0 0
    %717 = vmatpush.bf16.msra.mxu0 0
    %718 = vmatpush.bf16.msra.mxu0 %v648
    %719 = vmatpush.bf16.msra.mxu0 %v591
    %720 = vmatpush.bf16.msra.mxu0 %v583
    %721 = vmatpush.bf16.msra.mxu0 %v575
    %722 = vmatpush.bf16.msra.mxu0 %v567
    %723 = vmatmul.bf16.gmra.mxu0 %v260
    %v724 = vpop.f32.mrf.mxu0
    %v725 = vadd.f32 0.0, %v724
    %v726 = vpop.f32.mrf.mxu0
    %v727 = vadd.f32 0.0, %v726
    %728 = vdwg.mxu0
    %729 = vmatpush.bf16.msra.mxu0 0
    %730 = vmatpush.bf16.msra.mxu0 0
    %731 = vmatpush.bf16.msra.mxu0 0
    %732 = vmatpush.bf16.msra.mxu0 %v651
    %733 = vmatpush.bf16.msra.mxu0 %v592
    %734 = vmatpush.bf16.msra.mxu0 %v584
    %735 = vmatpush.bf16.msra.mxu0 %v576
    %736 = vmatpush.bf16.msra.mxu0 %v568
    %737 = vmatmul.bf16.gmra.mxu0 %v260
    %v738 = vpop.f32.mrf.mxu0
    %v739 = vadd.f32 0.0, %v738
    %v740 = vpop.f32.mrf.mxu0
    %v741 = vadd.f32 0.0, %v740
    %742 = vdwg.mxu0
    %743 = vmatpush.bf16.msra.mxu0 0
    %744 = vmatpush.bf16.msra.mxu0 0
    %745 = vmatpush.bf16.msra.mxu0 0
    %746 = vmatpush.bf16.msra.mxu0 %v654
    %747 = vmatpush.bf16.msra.mxu0 %v593
    %748 = vmatpush.bf16.msra.mxu0 %v585
    %749 = vmatpush.bf16.msra.mxu0 %v577
    %750 = vmatpush.bf16.msra.mxu0 %v569
    %751 = vmatmul.bf16.gmra.mxu0 %v260
    %v752 = vpop.f32.mrf.mxu0
    %v753 = vadd.f32 0.0, %v752
    %v754 = vpop.f32.mrf.mxu0
    %v755 = vadd.f32 0.0, %v754
    %756 = vdwg.mxu0
    %757 = vmatpush.bf16.msra.mxu0 0
    %758 = vmatpush.bf16.msra.mxu0 0
    %759 = vmatpush.bf16.msra.mxu0 0
    %760 = vmatpush.bf16.msra.mxu0 %v657
    %761 = vmatpush.bf16.msra.mxu0 %v594
    %762 = vmatpush.bf16.msra.mxu0 %v586
    %763 = vmatpush.bf16.msra.mxu0 %v578
    %764 = vmatpush.bf16.msra.mxu0 %v570
    %765 = vmatmul.bf16.gmra.mxu0 %v260
    %v766 = vpop.f32.mrf.mxu0
    %v767 = vadd.f32 0.0, %v766
    %v768 = vpop.f32.mrf.mxu0
    %v769 = vadd.f32 0.0, %v768
    %770 = vdwg.mxu0
    %s771 = scalar_lea.vmem %s0, 640
    %v772 = vld [vmem:[%s771] sm:$0xff]
    %v773 = vld [vmem:[%s771 + $0x8] sm:$0xff]
    %v774 = vld [vmem:[%s771 + $0x10] sm:$0xff]
    %v775 = vld [vmem:[%s771 + $0x18] sm:$0xff]
    %v776 = vld [vmem:[%s771 + $0x20] sm:$0xff]
    %v777 = vld [vmem:[%s771 + $0x28] sm:$0xff]
    %v778 = vld [vmem:[%s771 + $0x30] sm:$0xff]
    %v779 = vld [vmem:[%s771 + $0x38] sm:$0xff]
    %v780 = vld [vmem:[%s771 + $0x40] sm:$0xff]
    %v781 = vld [vmem:[%s771 + $0x48] sm:$0xff]
    %v782 = vld [vmem:[%s771 + $0x50] sm:$0xff]
    %v783 = vld [vmem:[%s771 + $0x58] sm:$0xff]
    %v784 = vld [vmem:[%s771 + $0x60] sm:$0xff]
    %v785 = vld [vmem:[%s771 + $0x68] sm:$0xff]
    %v786 = vld [vmem:[%s771 + $0x70] sm:$0xff]
    %v787 = vld [vmem:[%s771 + $0x78] sm:$0xff]
    %v788 = vld [vmem:[%s771 + $0x80] sm:$0xff]
    %v789 = vld [vmem:[%s771 + $0x88] sm:$0xff]
    %v790 = vld [vmem:[%s771 + $0x90] sm:$0xff]
    %v791 = vld [vmem:[%s771 + $0x98] sm:$0xff]
    %v792 = vld [vmem:[%s771 + $0xa0] sm:$0xff]
    %v793 = vld [vmem:[%s771 + $0xa8] sm:$0xff]
    %v794 = vld [vmem:[%s771 + $0xb0] sm:$0xff]
    %v795 = vld [vmem:[%s771 + $0xb8] sm:$0xff]
    %v796 = vld [vmem:[%s771 + $0xc0] sm:$0xff]
    %v797 = vld [vmem:[%s771 + $0xc8] sm:$0xff]
    %v798 = vld [vmem:[%s771 + $0xd0] sm:$0xff]
    %v799 = vld [vmem:[%s771 + $0xd8] sm:$0xff]
    %v800 = vld [vmem:[%s771 + $0xe0] sm:$0xff]
    %v801 = vld [vmem:[%s771 + $0xe8] sm:$0xff]
    %v802 = vld [vmem:[%s771 + $0xf0] sm:$0xff]
    %v803 = vld [vmem:[%s771 + $0xf8] sm:$0xff]
    %v804 = vld [vmem:[%s771 + $0x100] sm:$0xff]
    %v805 = vld [vmem:[%s771 + $0x108] sm:$0xff]
    %v806 = vld [vmem:[%s771 + $0x110] sm:$0xff]
    %v807 = vld [vmem:[%s771 + $0x118] sm:$0xff]
    %v808 = vld [vmem:[%s771 + $0x120] sm:$0x11]
    %v809 = vld [vmem:[%s771 + $0x128] sm:$0x11]
    %v810 = vld [vmem:[%s771 + $0x130] sm:$0x11]
    %v811 = vld [vmem:[%s771 + $0x138] sm:$0x11]
    %v852 = vunpack.c.l.b16 %v772
    %v853 = vunpack.c.h.b16 %v772
    %v854 = vunpack.c.l.b16 %v773
    %v855 = vunpack.c.h.b16 %v773
    %v856 = vunpack.c.l.b16 %v774
    %v857 = vunpack.c.h.b16 %v774
    %v858 = vunpack.c.l.b16 %v775
    %v859 = vunpack.c.h.b16 %v775
    %v860 = vunpack.c.l.b16 %v776
    %v861 = vunpack.c.h.b16 %v776
    %v862 = vunpack.c.l.b16 %v777
    %v863 = vunpack.c.h.b16 %v777
    %v864 = vunpack.c.l.b16 %v778
    %v865 = vunpack.c.h.b16 %v778
    %v866 = vunpack.c.l.b16 %v779
    %v867 = vunpack.c.h.b16 %v779
    %v868 = vunpack.c.l.b16 %v780
    %v869 = vunpack.c.h.b16 %v780
    %v870 = vunpack.c.l.b16 %v781
    %v871 = vunpack.c.h.b16 %v781
    %v872 = vunpack.c.l.b16 %v782
    %v873 = vunpack.c.h.b16 %v782
    %v874 = vunpack.c.l.b16 %v783
    %v875 = vunpack.c.h.b16 %v783
    %v876 = vunpack.c.l.b16 %v784
    %v877 = vunpack.c.h.b16 %v784
    %v878 = vunpack.c.l.b16 %v785
    %v879 = vunpack.c.h.b16 %v785
    %v880 = vunpack.c.l.b16 %v786
    %v881 = vunpack.c.h.b16 %v786
    %v882 = vunpack.c.l.b16 %v787
    %v883 = vunpack.c.h.b16 %v787
    %v884 = vunpack.c.l.b16 %v788
    %v885 = vunpack.c.h.b16 %v788
    %v886 = vunpack.c.l.b16 %v789
    %v887 = vunpack.c.h.b16 %v789
    %v888 = vunpack.c.l.b16 %v790
    %v889 = vunpack.c.h.b16 %v790
    %v890 = vunpack.c.l.b16 %v791
    %v891 = vunpack.c.h.b16 %v791
    %v892 = vunpack.c.l.b16 %v792
    %v893 = vunpack.c.h.b16 %v792
    %v894 = vunpack.c.l.b16 %v793
    %v895 = vunpack.c.h.b16 %v793
    %v896 = vunpack.c.l.b16 %v794
    %v897 = vunpack.c.h.b16 %v794
    %v898 = vunpack.c.l.b16 %v795
    %v899 = vunpack.c.h.b16 %v795
    %v900 = vunpack.c.l.b16 %v796
    %v901 = vunpack.c.h.b16 %v796
    %v902 = vunpack.c.l.b16 %v797
    %v903 = vunpack.c.h.b16 %v797
    %v904 = vunpack.c.l.b16 %v798
    %v905 = vunpack.c.h.b16 %v798
    %v906 = vunpack.c.l.b16 %v799
    %v907 = vunpack.c.h.b16 %v799
    %v908 = vunpack.c.l.b16 %v800
    %v909 = vunpack.c.h.b16 %v800
    %v910 = vunpack.c.l.b16 %v801
    %v911 = vunpack.c.h.b16 %v801
    %v912 = vunpack.c.l.b16 %v802
    %v913 = vunpack.c.h.b16 %v802
    %v914 = vunpack.c.l.b16 %v803
    %v915 = vunpack.c.h.b16 %v803
    %v916 = vunpack.c.l.b16 %v804
    %v917 = vunpack.c.h.b16 %v804
    %v918 = vunpack.c.l.b16 %v805
    %v919 = vunpack.c.h.b16 %v805
    %v920 = vunpack.c.l.b16 %v806
    %v921 = vunpack.c.h.b16 %v806
    %v922 = vunpack.c.l.b16 %v807
    %v923 = vunpack.c.h.b16 %v807
    %v924 = vunpack.c.l.b16 %v808
    %v925 = vunpack.c.h.b16 %v808
    %v926 = vunpack.c.l.b16 %v809
    %v927 = vunpack.c.h.b16 %v809
    %v928 = vunpack.c.l.b16 %v810
    %v929 = vunpack.c.h.b16 %v810
    %v930 = vunpack.c.l.b16 %v811
    %v931 = vunpack.c.h.b16 %v811
    %v932 = vpack.c.b16 %v860, %v852
    %v933 = vpack.c.b16 %v861, %v853
    %v934 = vpack.c.b16 %v862, %v854
    %v935 = vpack.c.b16 %v863, %v855
    %v936 = vpack.c.b16 %v864, %v856
    %v937 = vpack.c.b16 %v865, %v857
    %v938 = vpack.c.b16 %v866, %v858
    %v939 = vpack.c.b16 %v867, %v859
    %v940 = vpack.c.b16 %v876, %v868
    %v941 = vpack.c.b16 %v877, %v869
    %v942 = vpack.c.b16 %v878, %v870
    %v943 = vpack.c.b16 %v879, %v871
    %v944 = vpack.c.b16 %v880, %v872
    %v945 = vpack.c.b16 %v881, %v873
    %v946 = vpack.c.b16 %v882, %v874
    %v947 = vpack.c.b16 %v883, %v875
    %v948 = vpack.c.b16 %v892, %v884
    %v949 = vpack.c.b16 %v893, %v885
    %v950 = vpack.c.b16 %v894, %v886
    %v951 = vpack.c.b16 %v895, %v887
    %v952 = vpack.c.b16 %v896, %v888
    %v953 = vpack.c.b16 %v897, %v889
    %v954 = vpack.c.b16 %v898, %v890
    %v955 = vpack.c.b16 %v899, %v891
    %v956 = vpack.c.b16 %v908, %v900
    %v957 = vpack.c.b16 %v909, %v901
    %v958 = vpack.c.b16 %v910, %v902
    %v959 = vpack.c.b16 %v911, %v903
    %v960 = vpack.c.b16 %v912, %v904
    %v961 = vpack.c.b16 %v913, %v905
    %v962 = vpack.c.b16 %v914, %v906
    %v963 = vpack.c.b16 %v915, %v907
    %v964 = vpack.c.b16 %v924, %v916
    %v965 = vpack.c.b16 %v925, %v917
    %v966 = vpack.c.b16 %v926, %v918
    %v967 = vpack.c.b16 %v927, %v919
    %v968 = vpack.c.b16 %v928, %v920
    %v969 = vpack.c.b16 %v929, %v921
    %v970 = vpack.c.b16 %v930, %v922
    %v971 = vpack.c.b16 %v931, %v923
    %v1005 = vand.u32 %v964, %v265
    %v1008 = vand.u32 %v965, %v265
    %v1011 = vand.u32 %v966, %v265
    %v1014 = vand.u32 %v967, %v265
    %v1017 = vand.u32 %v968, %v265
    %v1020 = vand.u32 %v969, %v265
    %v1023 = vand.u32 %v970, %v265
    %v1026 = vand.u32 %v971, %v265
    %1028 = vmatpush.bf16.msra.mxu0 0
    %1029 = vmatpush.bf16.msra.mxu0 0
    %1030 = vmatpush.bf16.msra.mxu0 0
    %1031 = vmatpush.bf16.msra.mxu0 %v1005
    %1032 = vmatpush.bf16.msra.mxu0 %v956
    %1033 = vmatpush.bf16.msra.mxu0 %v948
    %1034 = vmatpush.bf16.msra.mxu0 %v940
    %1035 = vmatpush.bf16.msra.mxu0 %v932
    %1036 = vmatmul.bf16.gmra.mxu0 %v260
    %v1037 = vpop.f32.mrf.mxu0
    %v1038 = vadd.f32 0.0, %v1037
    %v1039 = vpop.f32.mrf.mxu0
    %v1040 = vadd.f32 0.0, %v1039
    %1041 = vdwg.mxu0
    %1042 = vmatpush.bf16.msra.mxu0 0
    %1043 = vmatpush.bf16.msra.mxu0 0
    %1044 = vmatpush.bf16.msra.mxu0 0
    %1045 = vmatpush.bf16.msra.mxu0 %v1008
    %1046 = vmatpush.bf16.msra.mxu0 %v957
    %1047 = vmatpush.bf16.msra.mxu0 %v949
    %1048 = vmatpush.bf16.msra.mxu0 %v941
    %1049 = vmatpush.bf16.msra.mxu0 %v933
    %1050 = vmatmul.bf16.gmra.mxu0 %v260
    %v1051 = vpop.f32.mrf.mxu0
    %v1052 = vadd.f32 0.0, %v1051
    %v1053 = vpop.f32.mrf.mxu0
    %v1054 = vadd.f32 0.0, %v1053
    %1055 = vdwg.mxu0
    %1056 = vmatpush.bf16.msra.mxu0 0
    %1057 = vmatpush.bf16.msra.mxu0 0
    %1058 = vmatpush.bf16.msra.mxu0 0
    %1059 = vmatpush.bf16.msra.mxu0 %v1011
    %1060 = vmatpush.bf16.msra.mxu0 %v958
    %1061 = vmatpush.bf16.msra.mxu0 %v950
    %1062 = vmatpush.bf16.msra.mxu0 %v942
    %1063 = vmatpush.bf16.msra.mxu0 %v934
    %1064 = vmatmul.bf16.gmra.mxu0 %v260
    %v1065 = vpop.f32.mrf.mxu0
    %v1066 = vadd.f32 0.0, %v1065
    %v1067 = vpop.f32.mrf.mxu0
    %v1068 = vadd.f32 0.0, %v1067
    %1069 = vdwg.mxu0
    %1070 = vmatpush.bf16.msra.mxu0 0
    %1071 = vmatpush.bf16.msra.mxu0 0
    %1072 = vmatpush.bf16.msra.mxu0 0
    %1073 = vmatpush.bf16.msra.mxu0 %v1014
    %1074 = vmatpush.bf16.msra.mxu0 %v959
    %1075 = vmatpush.bf16.msra.mxu0 %v951
    %1076 = vmatpush.bf16.msra.mxu0 %v943
    %1077 = vmatpush.bf16.msra.mxu0 %v935
    %1078 = vmatmul.bf16.gmra.mxu0 %v260
    %v1079 = vpop.f32.mrf.mxu0
    %v1080 = vadd.f32 0.0, %v1079
    %v1081 = vpop.f32.mrf.mxu0
    %v1082 = vadd.f32 0.0, %v1081
    %1083 = vdwg.mxu0
    %1084 = vmatpush.bf16.msra.mxu0 0
    %1085 = vmatpush.bf16.msra.mxu0 0
    %1086 = vmatpush.bf16.msra.mxu0 0
    %1087 = vmatpush.bf16.msra.mxu0 %v1017
    %1088 = vmatpush.bf16.msra.mxu0 %v960
    %1089 = vmatpush.bf16.msra.mxu0 %v952
    %1090 = vmatpush.bf16.msra.mxu0 %v944
    %1091 = vmatpush.bf16.msra.mxu0 %v936
    %1092 = vmatmul.bf16.gmra.mxu0 %v260
    %v1093 = vpop.f32.mrf.mxu0
    %v1094 = vadd.f32 0.0, %v1093
    %v1095 = vpop.f32.mrf.mxu0
    %v1096 = vadd.f32 0.0, %v1095
    %1097 = vdwg.mxu0
    %1098 = vmatpush.bf16.msra.mxu0 0
    %1099 = vmatpush.bf16.msra.mxu0 0
    %1100 = vmatpush.bf16.msra.mxu0 0
    %1101 = vmatpush.bf16.msra.mxu0 %v1020
    %1102 = vmatpush.bf16.msra.mxu0 %v961
    %1103 = vmatpush.bf16.msra.mxu0 %v953
    %1104 = vmatpush.bf16.msra.mxu0 %v945
    %1105 = vmatpush.bf16.msra.mxu0 %v937
    %1106 = vmatmul.bf16.gmra.mxu0 %v260
    %v1107 = vpop.f32.mrf.mxu0
    %v1108 = vadd.f32 0.0, %v1107
    %v1109 = vpop.f32.mrf.mxu0
    %v1110 = vadd.f32 0.0, %v1109
    %1111 = vdwg.mxu0
    %1112 = vmatpush.bf16.msra.mxu0 0
    %1113 = vmatpush.bf16.msra.mxu0 0
    %1114 = vmatpush.bf16.msra.mxu0 0
    %1115 = vmatpush.bf16.msra.mxu0 %v1023
    %1116 = vmatpush.bf16.msra.mxu0 %v962
    %1117 = vmatpush.bf16.msra.mxu0 %v954
    %1118 = vmatpush.bf16.msra.mxu0 %v946
    %1119 = vmatpush.bf16.msra.mxu0 %v938
    %1120 = vmatmul.bf16.gmra.mxu0 %v260
    %v1121 = vpop.f32.mrf.mxu0
    %v1122 = vadd.f32 0.0, %v1121
    %v1123 = vpop.f32.mrf.mxu0
    %v1124 = vadd.f32 0.0, %v1123
    %1125 = vdwg.mxu0
    %1126 = vmatpush.bf16.msra.mxu0 0
    %1127 = vmatpush.bf16.msra.mxu0 0
    %1128 = vmatpush.bf16.msra.mxu0 0
    %1129 = vmatpush.bf16.msra.mxu0 %v1026
    %1130 = vmatpush.bf16.msra.mxu0 %v963
    %1131 = vmatpush.bf16.msra.mxu0 %v955
    %1132 = vmatpush.bf16.msra.mxu0 %v947
    %1133 = vmatpush.bf16.msra.mxu0 %v939
    %1134 = vmatmul.bf16.gmra.mxu0 %v260
    %v1135 = vpop.f32.mrf.mxu0
    %v1136 = vadd.f32 0.0, %v1135
    %v1137 = vpop.f32.mrf.mxu0
    %v1138 = vadd.f32 0.0, %v1137
    %1139 = vdwg.mxu0
    %s1140 = scalar_lea.vmem %s0, 960
    %v1141 = vld [vmem:[%s1140] sm:$0xff]
    %v1142 = vld [vmem:[%s1140 + $0x8] sm:$0xff]
    %v1143 = vld [vmem:[%s1140 + $0x10] sm:$0xff]
    %v1144 = vld [vmem:[%s1140 + $0x18] sm:$0xff]
    %v1145 = vld [vmem:[%s1140 + $0x20] sm:$0xff]
    %v1146 = vld [vmem:[%s1140 + $0x28] sm:$0xff]
    %v1147 = vld [vmem:[%s1140 + $0x30] sm:$0xff]
    %v1148 = vld [vmem:[%s1140 + $0x38] sm:$0xff]
    %v1149 = vld [vmem:[%s1140 + $0x40] sm:$0xff]
    %v1150 = vld [vmem:[%s1140 + $0x48] sm:$0xff]
    %v1151 = vld [vmem:[%s1140 + $0x50] sm:$0xff]
    %v1152 = vld [vmem:[%s1140 + $0x58] sm:$0xff]
    %v1153 = vld [vmem:[%s1140 + $0x60] sm:$0xff]
    %v1154 = vld [vmem:[%s1140 + $0x68] sm:$0xff]
    %v1155 = vld [vmem:[%s1140 + $0x70] sm:$0xff]
    %v1156 = vld [vmem:[%s1140 + $0x78] sm:$0xff]
    %v1157 = vld [vmem:[%s1140 + $0x80] sm:$0xff]
    %v1158 = vld [vmem:[%s1140 + $0x88] sm:$0xff]
    %v1159 = vld [vmem:[%s1140 + $0x90] sm:$0xff]
    %v1160 = vld [vmem:[%s1140 + $0x98] sm:$0xff]
    %v1161 = vld [vmem:[%s1140 + $0xa0] sm:$0xff]
    %v1162 = vld [vmem:[%s1140 + $0xa8] sm:$0xff]
    %v1163 = vld [vmem:[%s1140 + $0xb0] sm:$0xff]
    %v1164 = vld [vmem:[%s1140 + $0xb8] sm:$0xff]
    %v1165 = vld [vmem:[%s1140 + $0xc0] sm:$0xff]
    %v1166 = vld [vmem:[%s1140 + $0xc8] sm:$0xff]
    %v1167 = vld [vmem:[%s1140 + $0xd0] sm:$0xff]
    %v1168 = vld [vmem:[%s1140 + $0xd8] sm:$0xff]
    %v1169 = vld [vmem:[%s1140 + $0xe0] sm:$0xff]
    %v1170 = vld [vmem:[%s1140 + $0xe8] sm:$0xff]
    %v1171 = vld [vmem:[%s1140 + $0xf0] sm:$0xff]
    %v1172 = vld [vmem:[%s1140 + $0xf8] sm:$0xff]
    %v1173 = vld [vmem:[%s1140 + $0x100] sm:$0xff]
    %v1174 = vld [vmem:[%s1140 + $0x108] sm:$0xff]
    %v1175 = vld [vmem:[%s1140 + $0x110] sm:$0xff]
    %v1176 = vld [vmem:[%s1140 + $0x118] sm:$0xff]
    %v1177 = vld [vmem:[%s1140 + $0x120] sm:$0x11]
    %v1178 = vld [vmem:[%s1140 + $0x128] sm:$0x11]
    %v1179 = vld [vmem:[%s1140 + $0x130] sm:$0x11]
    %v1180 = vld [vmem:[%s1140 + $0x138] sm:$0x11]
    %v1221 = vunpack.c.l.b16 %v1141
    %v1222 = vunpack.c.h.b16 %v1141
    %v1223 = vunpack.c.l.b16 %v1142
    %v1224 = vunpack.c.h.b16 %v1142
    %v1225 = vunpack.c.l.b16 %v1143
    %v1226 = vunpack.c.h.b16 %v1143
    %v1227 = vunpack.c.l.b16 %v1144
    %v1228 = vunpack.c.h.b16 %v1144
    %v1229 = vunpack.c.l.b16 %v1145
    %v1230 = vunpack.c.h.b16 %v1145
    %v1231 = vunpack.c.l.b16 %v1146
    %v1232 = vunpack.c.h.b16 %v1146
    %v1233 = vunpack.c.l.b16 %v1147
    %v1234 = vunpack.c.h.b16 %v1147
    %v1235 = vunpack.c.l.b16 %v1148
    %v1236 = vunpack.c.h.b16 %v1148
    %v1237 = vunpack.c.l.b16 %v1149
    %v1238 = vunpack.c.h.b16 %v1149
    %v1239 = vunpack.c.l.b16 %v1150
    %v1240 = vunpack.c.h.b16 %v1150
    %v1241 = vunpack.c.l.b16 %v1151
    %v1242 = vunpack.c.h.b16 %v1151
    %v1243 = vunpack.c.l.b16 %v1152
    %v1244 = vunpack.c.h.b16 %v1152
    %v1245 = vunpack.c.l.b16 %v1153
    %v1246 = vunpack.c.h.b16 %v1153
    %v1247 = vunpack.c.l.b16 %v1154
    %v1248 = vunpack.c.h.b16 %v1154
    %v1249 = vunpack.c.l.b16 %v1155
    %v1250 = vunpack.c.h.b16 %v1155
    %v1251 = vunpack.c.l.b16 %v1156
    %v1252 = vunpack.c.h.b16 %v1156
    %v1253 = vunpack.c.l.b16 %v1157
    %v1254 = vunpack.c.h.b16 %v1157
    %v1255 = vunpack.c.l.b16 %v1158
    %v1256 = vunpack.c.h.b16 %v1158
    %v1257 = vunpack.c.l.b16 %v1159
    %v1258 = vunpack.c.h.b16 %v1159
    %v1259 = vunpack.c.l.b16 %v1160
    %v1260 = vunpack.c.h.b16 %v1160
    %v1261 = vunpack.c.l.b16 %v1161
    %v1262 = vunpack.c.h.b16 %v1161
    %v1263 = vunpack.c.l.b16 %v1162
    %v1264 = vunpack.c.h.b16 %v1162
    %v1265 = vunpack.c.l.b16 %v1163
    %v1266 = vunpack.c.h.b16 %v1163
    %v1267 = vunpack.c.l.b16 %v1164
    %v1268 = vunpack.c.h.b16 %v1164
    %v1269 = vunpack.c.l.b16 %v1165
    %v1270 = vunpack.c.h.b16 %v1165
    %v1271 = vunpack.c.l.b16 %v1166
    %v1272 = vunpack.c.h.b16 %v1166
    %v1273 = vunpack.c.l.b16 %v1167
    %v1274 = vunpack.c.h.b16 %v1167
    %v1275 = vunpack.c.l.b16 %v1168
    %v1276 = vunpack.c.h.b16 %v1168
    %v1277 = vunpack.c.l.b16 %v1169
    %v1278 = vunpack.c.h.b16 %v1169
    %v1279 = vunpack.c.l.b16 %v1170
    %v1280 = vunpack.c.h.b16 %v1170
    %v1281 = vunpack.c.l.b16 %v1171
    %v1282 = vunpack.c.h.b16 %v1171
    %v1283 = vunpack.c.l.b16 %v1172
    %v1284 = vunpack.c.h.b16 %v1172
    %v1285 = vunpack.c.l.b16 %v1173
    %v1286 = vunpack.c.h.b16 %v1173
    %v1287 = vunpack.c.l.b16 %v1174
    %v1288 = vunpack.c.h.b16 %v1174
    %v1289 = vunpack.c.l.b16 %v1175
    %v1290 = vunpack.c.h.b16 %v1175
    %v1291 = vunpack.c.l.b16 %v1176
    %v1292 = vunpack.c.h.b16 %v1176
    %v1293 = vunpack.c.l.b16 %v1177
    %v1294 = vunpack.c.h.b16 %v1177
    %v1295 = vunpack.c.l.b16 %v1178
    %v1296 = vunpack.c.h.b16 %v1178
    %v1297 = vunpack.c.l.b16 %v1179
    %v1298 = vunpack.c.h.b16 %v1179
    %v1299 = vunpack.c.l.b16 %v1180
    %v1300 = vunpack.c.h.b16 %v1180
    %v1301 = vpack.c.b16 %v1229, %v1221
    %v1302 = vpack.c.b16 %v1230, %v1222
    %v1303 = vpack.c.b16 %v1231, %v1223
    %v1304 = vpack.c.b16 %v1232, %v1224
    %v1305 = vpack.c.b16 %v1233, %v1225
    %v1306 = vpack.c.b16 %v1234, %v1226
    %v1307 = vpack.c.b16 %v1235, %v1227
    %v1308 = vpack.c.b16 %v1236, %v1228
    %v1309 = vpack.c.b16 %v1245, %v1237
    %v1310 = vpack.c.b16 %v1246, %v1238
    %v1311 = vpack.c.b16 %v1247, %v1239
    %v1312 = vpack.c.b16 %v1248, %v1240
    %v1313 = vpack.c.b16 %v1249, %v1241
    %v1314 = vpack.c.b16 %v1250, %v1242
    %v1315 = vpack.c.b16 %v1251, %v1243
    %v1316 = vpack.c.b16 %v1252, %v1244
    %v1317 = vpack.c.b16 %v1261, %v1253
    %v1318 = vpack.c.b16 %v1262, %v1254
    %v1319 = vpack.c.b16 %v1263, %v1255
    %v1320 = vpack.c.b16 %v1264, %v1256
    %v1321 = vpack.c.b16 %v1265, %v1257
    %v1322 = vpack.c.b16 %v1266, %v1258
    %v1323 = vpack.c.b16 %v1267, %v1259
    %v1324 = vpack.c.b16 %v1268, %v1260
    %v1325 = vpack.c.b16 %v1277, %v1269
    %v1326 = vpack.c.b16 %v1278, %v1270
    %v1327 = vpack.c.b16 %v1279, %v1271
    %v1328 = vpack.c.b16 %v1280, %v1272
    %v1329 = vpack.c.b16 %v1281, %v1273
    %v1330 = vpack.c.b16 %v1282, %v1274
    %v1331 = vpack.c.b16 %v1283, %v1275
    %v1332 = vpack.c.b16 %v1284, %v1276
    %v1333 = vpack.c.b16 %v1293, %v1285
    %v1334 = vpack.c.b16 %v1294, %v1286
    %v1335 = vpack.c.b16 %v1295, %v1287
    %v1336 = vpack.c.b16 %v1296, %v1288
    %v1337 = vpack.c.b16 %v1297, %v1289
    %v1338 = vpack.c.b16 %v1298, %v1290
    %v1339 = vpack.c.b16 %v1299, %v1291
    %v1340 = vpack.c.b16 %v1300, %v1292
    %v1374 = vand.u32 %v1333, %v265
    %v1377 = vand.u32 %v1334, %v265
    %v1380 = vand.u32 %v1335, %v265
    %v1383 = vand.u32 %v1336, %v265
    %v1386 = vand.u32 %v1337, %v265
    %v1389 = vand.u32 %v1338, %v265
    %v1392 = vand.u32 %v1339, %v265
    %v1395 = vand.u32 %v1340, %v265
    %1397 = vmatpush.bf16.msra.mxu0 0
    %1398 = vmatpush.bf16.msra.mxu0 0
    %1399 = vmatpush.bf16.msra.mxu0 0
    %1400 = vmatpush.bf16.msra.mxu0 %v1374
    %1401 = vmatpush.bf16.msra.mxu0 %v1325
    %1402 = vmatpush.bf16.msra.mxu0 %v1317
    %1403 = vmatpush.bf16.msra.mxu0 %v1309
    %1404 = vmatpush.bf16.msra.mxu0 %v1301
    %1405 = vmatmul.bf16.gmra.mxu0 %v260
    %v1406 = vpop.f32.mrf.mxu0
    %v1407 = vadd.f32 0.0, %v1406
    %v1408 = vpop.f32.mrf.mxu0
    %v1409 = vadd.f32 0.0, %v1408
    %1410 = vdwg.mxu0
    %1411 = vmatpush.bf16.msra.mxu0 0
    %1412 = vmatpush.bf16.msra.mxu0 0
    %1413 = vmatpush.bf16.msra.mxu0 0
    %1414 = vmatpush.bf16.msra.mxu0 %v1377
    %1415 = vmatpush.bf16.msra.mxu0 %v1326
    %1416 = vmatpush.bf16.msra.mxu0 %v1318
    %1417 = vmatpush.bf16.msra.mxu0 %v1310
    %1418 = vmatpush.bf16.msra.mxu0 %v1302
    %1419 = vmatmul.bf16.gmra.mxu0 %v260
    %v1420 = vpop.f32.mrf.mxu0
    %v1421 = vadd.f32 0.0, %v1420
    %v1422 = vpop.f32.mrf.mxu0
    %v1423 = vadd.f32 0.0, %v1422
    %1424 = vdwg.mxu0
    %1425 = vmatpush.bf16.msra.mxu0 0
    %1426 = vmatpush.bf16.msra.mxu0 0
    %1427 = vmatpush.bf16.msra.mxu0 0
    %1428 = vmatpush.bf16.msra.mxu0 %v1380
    %1429 = vmatpush.bf16.msra.mxu0 %v1327
    %1430 = vmatpush.bf16.msra.mxu0 %v1319
    %1431 = vmatpush.bf16.msra.mxu0 %v1311
    %1432 = vmatpush.bf16.msra.mxu0 %v1303
    %1433 = vmatmul.bf16.gmra.mxu0 %v260
    %v1434 = vpop.f32.mrf.mxu0
    %v1435 = vadd.f32 0.0, %v1434
    %v1436 = vpop.f32.mrf.mxu0
    %v1437 = vadd.f32 0.0, %v1436
    %1438 = vdwg.mxu0
    %1439 = vmatpush.bf16.msra.mxu0 0
    %1440 = vmatpush.bf16.msra.mxu0 0
    %1441 = vmatpush.bf16.msra.mxu0 0
    %1442 = vmatpush.bf16.msra.mxu0 %v1383
    %1443 = vmatpush.bf16.msra.mxu0 %v1328
    %1444 = vmatpush.bf16.msra.mxu0 %v1320
    %1445 = vmatpush.bf16.msra.mxu0 %v1312
    %1446 = vmatpush.bf16.msra.mxu0 %v1304
    %1447 = vmatmul.bf16.gmra.mxu0 %v260
    %v1448 = vpop.f32.mrf.mxu0
    %v1449 = vadd.f32 0.0, %v1448
    %v1450 = vpop.f32.mrf.mxu0
    %v1451 = vadd.f32 0.0, %v1450
    %1452 = vdwg.mxu0
    %1453 = vmatpush.bf16.msra.mxu0 0
    %1454 = vmatpush.bf16.msra.mxu0 0
    %1455 = vmatpush.bf16.msra.mxu0 0
    %1456 = vmatpush.bf16.msra.mxu0 %v1386
    %1457 = vmatpush.bf16.msra.mxu0 %v1329
    %1458 = vmatpush.bf16.msra.mxu0 %v1321
    %1459 = vmatpush.bf16.msra.mxu0 %v1313
    %1460 = vmatpush.bf16.msra.mxu0 %v1305
    %1461 = vmatmul.bf16.gmra.mxu0 %v260
    %v1462 = vpop.f32.mrf.mxu0
    %v1463 = vadd.f32 0.0, %v1462
    %v1464 = vpop.f32.mrf.mxu0
    %v1465 = vadd.f32 0.0, %v1464
    %1466 = vdwg.mxu0
    %1467 = vmatpush.bf16.msra.mxu0 0
    %1468 = vmatpush.bf16.msra.mxu0 0
    %1469 = vmatpush.bf16.msra.mxu0 0
    %1470 = vmatpush.bf16.msra.mxu0 %v1389
    %1471 = vmatpush.bf16.msra.mxu0 %v1330
    %1472 = vmatpush.bf16.msra.mxu0 %v1322
    %1473 = vmatpush.bf16.msra.mxu0 %v1314
    %1474 = vmatpush.bf16.msra.mxu0 %v1306
    %1475 = vmatmul.bf16.gmra.mxu0 %v260
    %v1476 = vpop.f32.mrf.mxu0
    %v1477 = vadd.f32 0.0, %v1476
    %v1478 = vpop.f32.mrf.mxu0
    %v1479 = vadd.f32 0.0, %v1478
    %1480 = vdwg.mxu0
    %1481 = vmatpush.bf16.msra.mxu0 0
    %1482 = vmatpush.bf16.msra.mxu0 0
    %1483 = vmatpush.bf16.msra.mxu0 0
    %1484 = vmatpush.bf16.msra.mxu0 %v1392
    %1485 = vmatpush.bf16.msra.mxu0 %v1331
    %1486 = vmatpush.bf16.msra.mxu0 %v1323
    %1487 = vmatpush.bf16.msra.mxu0 %v1315
    %1488 = vmatpush.bf16.msra.mxu0 %v1307
    %1489 = vmatmul.bf16.gmra.mxu0 %v260
    %v1490 = vpop.f32.mrf.mxu0
    %v1491 = vadd.f32 0.0, %v1490
    %v1492 = vpop.f32.mrf.mxu0
    %v1493 = vadd.f32 0.0, %v1492
    %1494 = vdwg.mxu0
    %1495 = vmatpush.bf16.msra.mxu0 0
    %1496 = vmatpush.bf16.msra.mxu0 0
    %1497 = vmatpush.bf16.msra.mxu0 0
    %1498 = vmatpush.bf16.msra.mxu0 %v1395
    %1499 = vmatpush.bf16.msra.mxu0 %v1332
    %1500 = vmatpush.bf16.msra.mxu0 %v1324
    %1501 = vmatpush.bf16.msra.mxu0 %v1316
    %1502 = vmatpush.bf16.msra.mxu0 %v1308
    %1503 = vmatmul.bf16.gmra.mxu0 %v260
    %v1504 = vpop.f32.mrf.mxu0
    %v1505 = vadd.f32 0.0, %v1504
    %v1506 = vpop.f32.mrf.mxu0
    %v1507 = vadd.f32 0.0, %v1506
    %1508 = vdwg.mxu0
    %v1509 = vmax.f32 %v300, %v669
    %v1510 = vmax.f32 %v314, %v683
    %v1511 = vmax.f32 %v328, %v697
    %v1512 = vmax.f32 %v342, %v711
    %v1513 = vmax.f32 %v356, %v725
    %v1514 = vmax.f32 %v370, %v739
    %v1515 = vmax.f32 %v384, %v753
    %v1516 = vmax.f32 %v398, %v767
    %v1517 = vmax.f32 %v302, %v671
    %v1518 = vmax.f32 %v316, %v685
    %v1519 = vmax.f32 %v330, %v699
    %v1520 = vmax.f32 %v344, %v713
    %v1521 = vmax.f32 %v358, %v727
    %v1522 = vmax.f32 %v372, %v741
    %v1523 = vmax.f32 %v386, %v755
    %v1524 = vmax.f32 %v400, %v769
    %v1525 = vmax.f32 %v1038, %v1407
    %v1526 = vmax.f32 %v1052, %v1421
    %v1527 = vmax.f32 %v1066, %v1435
    %v1528 = vmax.f32 %v1080, %v1449
    %v1529 = vmax.f32 %v1094, %v1463
    %v1530 = vmax.f32 %v1108, %v1477
    %v1531 = vmax.f32 %v1122, %v1491
    %v1532 = vmax.f32 %v1136, %v1505
    %v1533 = vmax.f32 %v1040, %v1409
    %v1534 = vmax.f32 %v1054, %v1423
    %v1535 = vmax.f32 %v1068, %v1437
    %v1536 = vmax.f32 %v1082, %v1451
    %v1537 = vmax.f32 %v1096, %v1465
    %v1538 = vmax.f32 %v1110, %v1479
    %v1539 = vmax.f32 %v1124, %v1493
    %v1540 = vmax.f32 %v1138, %v1507
    %v1541 = vmax.f32 %v1509, %v1525
    %v1542 = vmax.f32 %v1510, %v1526
    %v1543 = vmax.f32 %v1511, %v1527
    %v1544 = vmax.f32 %v1512, %v1528
    %v1545 = vmax.f32 %v1513, %v1529
    %v1546 = vmax.f32 %v1514, %v1530
    %v1547 = vmax.f32 %v1515, %v1531
    %v1548 = vmax.f32 %v1516, %v1532
    %v1549 = vmax.f32 %v1517, %v1533
    %v1550 = vmax.f32 %v1518, %v1534
    %v1551 = vmax.f32 %v1519, %v1535
    %v1552 = vmax.f32 %v1520, %v1536
    %v1553 = vmax.f32 %v1521, %v1537
    %v1554 = vmax.f32 %v1522, %v1538
    %v1555 = vmax.f32 %v1523, %v1539
    %v1556 = vmax.f32 %v1524, %v1540
    %v1557 = vmax.f32 %v1541, 0.0
    %v1558 = vmax.f32 %v1542, 0.0
    %v1559 = vmax.f32 %v1543, 0.0
    %v1560 = vmax.f32 %v1544, 0.0
    %v1561 = vmax.f32 %v1545, 0.0
    %v1562 = vmax.f32 %v1546, 0.0
    %v1563 = vmax.f32 %v1547, 0.0
    %v1564 = vmax.f32 %v1548, 0.0
    %v1565 = vmax.f32 %v1549, 0.0
    %v1566 = vmax.f32 %v1550, 0.0
    %v1567 = vmax.f32 %v1551, 0.0
    %v1568 = vmax.f32 %v1552, 0.0
    %v1569 = vmax.f32 %v1553, 0.0
    %v1570 = vmax.f32 %v1554, 0.0
    %v1571 = vmax.f32 %v1555, 0.0
    %v1572 = vmax.f32 %v1556, 0.0
    %v1589 = vrot.slane %v1558, 7
    %v1590 = vrot.slane %v1559, 6
    %v1591 = vrot.slane %v1560, 5
    %v1592 = vrot.slane %v1561, 4
    %v1593 = vrot.slane %v1562, 3
    %v1594 = vrot.slane %v1563, 2
    %v1595 = vrot.slane %v1564, 1
    %v1596 = vrot.slane %v1566, 7
    %v1597 = vrot.slane %v1567, 6
    %v1598 = vrot.slane %v1568, 5
    %v1599 = vrot.slane %v1569, 4
    %v1600 = vrot.slane %v1570, 3
    %v1601 = vrot.slane %v1571, 2
    %v1602 = vrot.slane %v1572, 1
    %vm1603 = vcmask 1040384
    %v1604 = vsel %vm1603, %v1557, %v1589
    %vm1605 = vcmask 1042434
    %v1606 = vsel %vm1605, %v1590, %v1591
    %vm1607 = vcmask 1041408
    %v1608 = vsel %vm1607, %v1604, %v1606
    %vm1609 = vcmask 1044484
    %v1610 = vsel %vm1609, %v1592, %v1593
    %vm1611 = vcmask 1046534
    %v1612 = vsel %vm1611, %v1594, %v1595
    %vm1613 = vcmask 1045508
    %v1614 = vsel %vm1613, %v1610, %v1612
    %v1615 = vsel %vm262, %v1608, %v1614
    %vm1616 = vcmask 1041409
    %v1617 = vsel %vm1616, %v1557, %v1589
    %vm1618 = vcmask 1043459
    %v1619 = vsel %vm1618, %v1590, %v1591
    %vm1620 = vcmask 1042433
    %v1621 = vsel %vm1620, %v1617, %v1619
    %vm1622 = vcmask 1045509
    %v1623 = vsel %vm1622, %v1592, %v1593
    %vm1624 = vcmask 1046528
    %v1625 = vsel %vm1624, %v1595, %v1594
    %vm1626 = vcmask 1046533
    %v1627 = vsel %vm1626, %v1623, %v1625
    %vm1628 = vcmask 1044481
    %v1629 = vsel %vm1628, %v1621, %v1627
    %v1630 = vrot.slane %v1629, 1
    %v1631 = vsel %vm1605, %v1557, %v1589
    %v1632 = vsel %vm1609, %v1590, %v1591
    %vm1633 = vcmask 1043458
    %v1634 = vsel %vm1633, %v1631, %v1632
    %v1635 = vsel %vm1611, %v1592, %v1593
    %v1636 = vsel %vm1603, %v1594, %v1595
    %vm1637 = vcmask 1045504
    %v1638 = vsel %vm1637, %v1636, %v1635
    %vm1639 = vcmask 1045506
    %v1640 = vsel %vm1639, %v1634, %v1638
    %v1641 = vrot.slane %v1640, 2
    %v1642 = vsel %vm1618, %v1557, %v1589
    %v1643 = vsel %vm1622, %v1590, %v1591
    %vm1644 = vcmask 1044483
    %v1645 = vsel %vm1644, %v1642, %v1643
    %v1646 = vsel %vm1624, %v1593, %v1592
    %v1647 = vsel %vm1616, %v1594, %v1595
    %vm1648 = vcmask 1046529
    %v1649 = vsel %vm1648, %v1647, %v1646
    %vm1650 = vcmask 1046531
    %v1651 = vsel %vm1650, %v1645, %v1649
    %v1652 = vrot.slane %v1651, 3
    %v1653 = vsel %vm1609, %v1557, %v1589
    %v1654 = vsel %vm1611, %v1590, %v1591
    %v1655 = vsel %vm1613, %v1653, %v1654
    %v1656 = vsel %vm1603, %v1592, %v1593
    %v1657 = vsel %vm1605, %v1594, %v1595
    %v1658 = vsel %vm1607, %v1656, %v1657
    %v1659 = vsel %vm262, %v1658, %v1655
    %v1660 = vrot.slane %v1659, 4
    %v1661 = vsel %vm1622, %v1557, %v1589
    %v1662 = vsel %vm1624, %v1591, %v1590
    %v1663 = vsel %vm1626, %v1661, %v1662
    %v1664 = vsel %vm1616, %v1592, %v1593
    %v1665 = vsel %vm1618, %v1594, %v1595
    %v1666 = vsel %vm1620, %v1664, %v1665
    %v1667 = vsel %vm1628, %v1666, %v1663
    %v1668 = vrot.slane %v1667, 5
    %v1669 = vsel %vm1611, %v1557, %v1589
    %v1670 = vsel %vm1603, %v1590, %v1591
    %v1671 = vsel %vm1637, %v1670, %v1669
    %v1672 = vsel %vm1605, %v1592, %v1593
    %v1673 = vsel %vm1609, %v1594, %v1595
    %v1674 = vsel %vm1633, %v1672, %v1673
    %v1675 = vsel %vm1639, %v1674, %v1671
    %v1676 = vrot.slane %v1675, 6
    %v1677 = vsel %vm1624, %v1589, %v1557
    %v1678 = vsel %vm1616, %v1590, %v1591
    %v1679 = vsel %vm1648, %v1678, %v1677
    %v1680 = vsel %vm1618, %v1592, %v1593
    %v1681 = vsel %vm1622, %v1594, %v1595
    %v1682 = vsel %vm1644, %v1680, %v1681
    %v1683 = vsel %vm1650, %v1682, %v1679
    %v1684 = vrot.slane %v1683, 7
    %v1685 = vsel %vm1603, %v1565, %v1596
    %v1686 = vsel %vm1605, %v1597, %v1598
    %v1687 = vsel %vm1607, %v1685, %v1686
    %v1688 = vsel %vm1609, %v1599, %v1600
    %v1689 = vsel %vm1611, %v1601, %v1602
    %v1690 = vsel %vm1613, %v1688, %v1689
    %v1691 = vsel %vm262, %v1687, %v1690
    %v1692 = vsel %vm1616, %v1565, %v1596
    %v1693 = vsel %vm1618, %v1597, %v1598
    %v1694 = vsel %vm1620, %v1692, %v1693
    %v1695 = vsel %vm1622, %v1599, %v1600
    %v1696 = vsel %vm1624, %v1602, %v1601
    %v1697 = vsel %vm1626, %v1695, %v1696
    %v1698 = vsel %vm1628, %v1694, %v1697
    %v1699 = vrot.slane %v1698, 1
    %v1710 = vld [vmem:[%s2] sm:$0xff]
    %v1711 = vld [vmem:[%s2 + $0x8] sm:$0xff]
    %v1712 = vld [vmem:[%s2 + $0x10] sm:$0xff]
    %v1713 = vld [vmem:[%s2 + $0x18] sm:$0xff]
    %v1714 = vld [vmem:[%s2 + $0x20] sm:$0xff]
    %v1715 = vld [vmem:[%s2 + $0x28] sm:$0xff]
    %v1716 = vld [vmem:[%s2 + $0x30] sm:$0xff]
    %v1717 = vld [vmem:[%s2 + $0x38] sm:$0xff]
    %v1718 = vld [vmem:[%s2 + $0x40] sm:$0xff]
    %v1719 = vld [vmem:[%s2 + $0x48] sm:$0xff]
    %v1720 = vld [vmem:[%s2 + $0x50] sm:$0xff]
    %v1721 = vld [vmem:[%s2 + $0x58] sm:$0xff]
    %v1722 = vld [vmem:[%s2 + $0x60] sm:$0xff]
    %v1723 = vld [vmem:[%s2 + $0x68] sm:$0xff]
    %v1724 = vld [vmem:[%s2 + $0x70] sm:$0xff]
    %v1725 = vld [vmem:[%s2 + $0x78] sm:$0xff]
    %s1726 = scalar_lea.vmem %s2, 128
    %v1727 = vld [vmem:[%s1726] sm:$0xff]
    %v1728 = vld [vmem:[%s1726 + $0x8] sm:$0xff]
    %v1729 = vld [vmem:[%s1726 + $0x10] sm:$0xff]
    %v1730 = vld [vmem:[%s1726 + $0x18] sm:$0xff]
    %v1731 = vld [vmem:[%s1726 + $0x20] sm:$0xff]
    %v1732 = vld [vmem:[%s1726 + $0x28] sm:$0xff]
    %v1733 = vld [vmem:[%s1726 + $0x30] sm:$0xff]
    %v1734 = vld [vmem:[%s1726 + $0x38] sm:$0xff]
    %v1735 = vld [vmem:[%s1726 + $0x40] sm:$0xff]
    %v1736 = vld [vmem:[%s1726 + $0x48] sm:$0xff]
    %v1737 = vld [vmem:[%s1726 + $0x50] sm:$0xff]
    %v1738 = vld [vmem:[%s1726 + $0x58] sm:$0xff]
    %v1739 = vld [vmem:[%s1726 + $0x60] sm:$0xff]
    %v1740 = vld [vmem:[%s1726 + $0x68] sm:$0xff]
    %v1741 = vld [vmem:[%s1726 + $0x70] sm:$0xff]
    %v1742 = vld [vmem:[%s1726 + $0x78] sm:$0xff]
    %1743 = vmatpush.msra.mxu0 %v1742
    %1744 = vmatpush.msra.mxu0 %v1741
    %1745 = vmatpush.msra.mxu0 %v1740
    %1746 = vmatpush.msra.mxu0 %v1739
    %1747 = vmatpush.msra.mxu0 %v1738
    %1748 = vmatpush.msra.mxu0 %v1737
    %1749 = vmatpush.msra.mxu0 %v1736
    %1750 = vmatpush.msra.mxu0 %v1735
    %1751 = vmatpush.msra.mxu0 %v1734
    %1752 = vmatpush.msra.mxu0 %v1733
    %1753 = vmatpush.msra.mxu0 %v1732
    %1754 = vmatpush.msra.mxu0 %v1731
    %1755 = vmatpush.msra.mxu0 %v1730
    %1756 = vmatpush.msra.mxu0 %v1729
    %1757 = vmatpush.msra.mxu0 %v1728
    %1758 = vmatpush.msra.mxu0 %v1727
    %1759 = vmatmul.f32.gmra.mxu0 %v1630
    %v1760 = vpop.f32.mrf.mxu0
    %v1761 = vadd.f32 0.0, %v1760
    %1762 = vdwg.mxu0
    %1763 = vmatpush.msra.mxu0 %v1725
    %1764 = vmatpush.msra.mxu0 %v1724
    %1765 = vmatpush.msra.mxu0 %v1723
    %1766 = vmatpush.msra.mxu0 %v1722
    %1767 = vmatpush.msra.mxu0 %v1721
    %1768 = vmatpush.msra.mxu0 %v1720
    %1769 = vmatpush.msra.mxu0 %v1719
    %1770 = vmatpush.msra.mxu0 %v1718
    %1771 = vmatpush.msra.mxu0 %v1717
    %1772 = vmatpush.msra.mxu0 %v1716
    %1773 = vmatpush.msra.mxu0 %v1715
    %1774 = vmatpush.msra.mxu0 %v1714
    %1775 = vmatpush.msra.mxu0 %v1713
    %1776 = vmatpush.msra.mxu0 %v1712
    %1777 = vmatpush.msra.mxu0 %v1711
    %1778 = vmatpush.msra.mxu0 %v1710
    %1779 = vmatmul.f32.gmra.mxu0 %v1615
    %v1780 = vpop.f32.mrf.mxu0
    %v1781 = vadd.f32 %v1761, %v1780
    %1782 = vdwg.mxu0
    %s1783 = scalar_lea.vmem %s2, 256
    %v1784 = vld [vmem:[%s1783] sm:$0xff]
    %v1785 = vld [vmem:[%s1783 + $0x8] sm:$0xff]
    %v1786 = vld [vmem:[%s1783 + $0x10] sm:$0xff]
    %v1787 = vld [vmem:[%s1783 + $0x18] sm:$0xff]
    %v1788 = vld [vmem:[%s1783 + $0x20] sm:$0xff]
    %v1789 = vld [vmem:[%s1783 + $0x28] sm:$0xff]
    %v1790 = vld [vmem:[%s1783 + $0x30] sm:$0xff]
    %v1791 = vld [vmem:[%s1783 + $0x38] sm:$0xff]
    %v1792 = vld [vmem:[%s1783 + $0x40] sm:$0xff]
    %v1793 = vld [vmem:[%s1783 + $0x48] sm:$0xff]
    %v1794 = vld [vmem:[%s1783 + $0x50] sm:$0xff]
    %v1795 = vld [vmem:[%s1783 + $0x58] sm:$0xff]
    %v1796 = vld [vmem:[%s1783 + $0x60] sm:$0xff]
    %v1797 = vld [vmem:[%s1783 + $0x68] sm:$0xff]
    %v1798 = vld [vmem:[%s1783 + $0x70] sm:$0xff]
    %v1799 = vld [vmem:[%s1783 + $0x78] sm:$0xff]
    %1800 = vmatpush.msra.mxu0 %v1799
    %1801 = vmatpush.msra.mxu0 %v1798
    %1802 = vmatpush.msra.mxu0 %v1797
    %1803 = vmatpush.msra.mxu0 %v1796
    %1804 = vmatpush.msra.mxu0 %v1795
    %1805 = vmatpush.msra.mxu0 %v1794
    %1806 = vmatpush.msra.mxu0 %v1793
    %1807 = vmatpush.msra.mxu0 %v1792
    %1808 = vmatpush.msra.mxu0 %v1791
    %1809 = vmatpush.msra.mxu0 %v1790
    %1810 = vmatpush.msra.mxu0 %v1789
    %1811 = vmatpush.msra.mxu0 %v1788
    %1812 = vmatpush.msra.mxu0 %v1787
    %1813 = vmatpush.msra.mxu0 %v1786
    %1814 = vmatpush.msra.mxu0 %v1785
    %1815 = vmatpush.msra.mxu0 %v1784
    %1816 = vmatmul.f32.gmra.mxu0 %v1641
    %v1817 = vpop.f32.mrf.mxu0
    %v1818 = vadd.f32 0.0, %v1817
    %1819 = vdwg.mxu0
    %v1820 = vadd.f32 %v1781, %v1818
    %s1821 = scalar_lea.vmem %s2, 384
    %v1822 = vld [vmem:[%s1821] sm:$0xff]
    %v1823 = vld [vmem:[%s1821 + $0x8] sm:$0xff]
    %v1824 = vld [vmem:[%s1821 + $0x10] sm:$0xff]
    %v1825 = vld [vmem:[%s1821 + $0x18] sm:$0xff]
    %v1826 = vld [vmem:[%s1821 + $0x20] sm:$0xff]
    %v1827 = vld [vmem:[%s1821 + $0x28] sm:$0xff]
    %v1828 = vld [vmem:[%s1821 + $0x30] sm:$0xff]
    %v1829 = vld [vmem:[%s1821 + $0x38] sm:$0xff]
    %v1830 = vld [vmem:[%s1821 + $0x40] sm:$0xff]
    %v1831 = vld [vmem:[%s1821 + $0x48] sm:$0xff]
    %v1832 = vld [vmem:[%s1821 + $0x50] sm:$0xff]
    %v1833 = vld [vmem:[%s1821 + $0x58] sm:$0xff]
    %v1834 = vld [vmem:[%s1821 + $0x60] sm:$0xff]
    %v1835 = vld [vmem:[%s1821 + $0x68] sm:$0xff]
    %v1836 = vld [vmem:[%s1821 + $0x70] sm:$0xff]
    %v1837 = vld [vmem:[%s1821 + $0x78] sm:$0xff]
    %1838 = vmatpush.msra.mxu0 %v1837
    %1839 = vmatpush.msra.mxu0 %v1836
    %1840 = vmatpush.msra.mxu0 %v1835
    %1841 = vmatpush.msra.mxu0 %v1834
    %1842 = vmatpush.msra.mxu0 %v1833
    %1843 = vmatpush.msra.mxu0 %v1832
    %1844 = vmatpush.msra.mxu0 %v1831
    %1845 = vmatpush.msra.mxu0 %v1830
    %1846 = vmatpush.msra.mxu0 %v1829
    %1847 = vmatpush.msra.mxu0 %v1828
    %1848 = vmatpush.msra.mxu0 %v1827
    %1849 = vmatpush.msra.mxu0 %v1826
    %1850 = vmatpush.msra.mxu0 %v1825
    %1851 = vmatpush.msra.mxu0 %v1824
    %1852 = vmatpush.msra.mxu0 %v1823
    %1853 = vmatpush.msra.mxu0 %v1822
    %1854 = vmatmul.f32.gmra.mxu0 %v1652
    %v1855 = vpop.f32.mrf.mxu0
    %v1856 = vadd.f32 0.0, %v1855
    %1857 = vdwg.mxu0
    %v1858 = vadd.f32 %v1820, %v1856
    %s1859 = scalar_lea.vmem %s2, 512
    %v1860 = vld [vmem:[%s1859] sm:$0xff]
    %v1861 = vld [vmem:[%s1859 + $0x8] sm:$0xff]
    %v1862 = vld [vmem:[%s1859 + $0x10] sm:$0xff]
    %v1863 = vld [vmem:[%s1859 + $0x18] sm:$0xff]
    %v1864 = vld [vmem:[%s1859 + $0x20] sm:$0xff]
    %v1865 = vld [vmem:[%s1859 + $0x28] sm:$0xff]
    %v1866 = vld [vmem:[%s1859 + $0x30] sm:$0xff]
    %v1867 = vld [vmem:[%s1859 + $0x38] sm:$0xff]
    %v1868 = vld [vmem:[%s1859 + $0x40] sm:$0xff]
    %v1869 = vld [vmem:[%s1859 + $0x48] sm:$0xff]
    %v1870 = vld [vmem:[%s1859 + $0x50] sm:$0xff]
    %v1871 = vld [vmem:[%s1859 + $0x58] sm:$0xff]
    %v1872 = vld [vmem:[%s1859 + $0x60] sm:$0xff]
    %v1873 = vld [vmem:[%s1859 + $0x68] sm:$0xff]
    %v1874 = vld [vmem:[%s1859 + $0x70] sm:$0xff]
    %v1875 = vld [vmem:[%s1859 + $0x78] sm:$0xff]
    %1876 = vmatpush.msra.mxu0 %v1875
    %1877 = vmatpush.msra.mxu0 %v1874
    %1878 = vmatpush.msra.mxu0 %v1873
    %1879 = vmatpush.msra.mxu0 %v1872
    %1880 = vmatpush.msra.mxu0 %v1871
    %1881 = vmatpush.msra.mxu0 %v1870
    %1882 = vmatpush.msra.mxu0 %v1869
    %1883 = vmatpush.msra.mxu0 %v1868
    %1884 = vmatpush.msra.mxu0 %v1867
    %1885 = vmatpush.msra.mxu0 %v1866
    %1886 = vmatpush.msra.mxu0 %v1865
    %1887 = vmatpush.msra.mxu0 %v1864
    %1888 = vmatpush.msra.mxu0 %v1863
    %1889 = vmatpush.msra.mxu0 %v1862
    %1890 = vmatpush.msra.mxu0 %v1861
    %1891 = vmatpush.msra.mxu0 %v1860
    %1892 = vmatmul.f32.gmra.mxu0 %v1660
    %v1893 = vpop.f32.mrf.mxu0
    %v1894 = vadd.f32 0.0, %v1893
    %1895 = vdwg.mxu0
    %v1896 = vadd.f32 %v1858, %v1894
    %s1897 = scalar_lea.vmem %s2, 640
    %v1898 = vld [vmem:[%s1897] sm:$0xff]
    %v1899 = vld [vmem:[%s1897 + $0x8] sm:$0xff]
    %v1900 = vld [vmem:[%s1897 + $0x10] sm:$0xff]
    %v1901 = vld [vmem:[%s1897 + $0x18] sm:$0xff]
    %v1902 = vld [vmem:[%s1897 + $0x20] sm:$0xff]
    %v1903 = vld [vmem:[%s1897 + $0x28] sm:$0xff]
    %v1904 = vld [vmem:[%s1897 + $0x30] sm:$0xff]
    %v1905 = vld [vmem:[%s1897 + $0x38] sm:$0xff]
    %v1906 = vld [vmem:[%s1897 + $0x40] sm:$0xff]
    %v1907 = vld [vmem:[%s1897 + $0x48] sm:$0xff]
    %v1908 = vld [vmem:[%s1897 + $0x50] sm:$0xff]
    %v1909 = vld [vmem:[%s1897 + $0x58] sm:$0xff]
    %v1910 = vld [vmem:[%s1897 + $0x60] sm:$0xff]
    %v1911 = vld [vmem:[%s1897 + $0x68] sm:$0xff]
    %v1912 = vld [vmem:[%s1897 + $0x70] sm:$0xff]
    %v1913 = vld [vmem:[%s1897 + $0x78] sm:$0xff]
    %1914 = vmatpush.msra.mxu0 %v1913
    %1915 = vmatpush.msra.mxu0 %v1912
    %1916 = vmatpush.msra.mxu0 %v1911
    %1917 = vmatpush.msra.mxu0 %v1910
    %1918 = vmatpush.msra.mxu0 %v1909
    %1919 = vmatpush.msra.mxu0 %v1908
    %1920 = vmatpush.msra.mxu0 %v1907
    %1921 = vmatpush.msra.mxu0 %v1906
    %1922 = vmatpush.msra.mxu0 %v1905
    %1923 = vmatpush.msra.mxu0 %v1904
    %1924 = vmatpush.msra.mxu0 %v1903
    %1925 = vmatpush.msra.mxu0 %v1902
    %1926 = vmatpush.msra.mxu0 %v1901
    %1927 = vmatpush.msra.mxu0 %v1900
    %1928 = vmatpush.msra.mxu0 %v1899
    %1929 = vmatpush.msra.mxu0 %v1898
    %1930 = vmatmul.f32.gmra.mxu0 %v1668
    %v1931 = vpop.f32.mrf.mxu0
    %v1932 = vadd.f32 0.0, %v1931
    %1933 = vdwg.mxu0
    %v1934 = vadd.f32 %v1896, %v1932
    %s1935 = scalar_lea.vmem %s2, 768
    %v1936 = vld [vmem:[%s1935] sm:$0xff]
    %v1937 = vld [vmem:[%s1935 + $0x8] sm:$0xff]
    %v1938 = vld [vmem:[%s1935 + $0x10] sm:$0xff]
    %v1939 = vld [vmem:[%s1935 + $0x18] sm:$0xff]
    %v1940 = vld [vmem:[%s1935 + $0x20] sm:$0xff]
    %v1941 = vld [vmem:[%s1935 + $0x28] sm:$0xff]
    %v1942 = vld [vmem:[%s1935 + $0x30] sm:$0xff]
    %v1943 = vld [vmem:[%s1935 + $0x38] sm:$0xff]
    %v1944 = vld [vmem:[%s1935 + $0x40] sm:$0xff]
    %v1945 = vld [vmem:[%s1935 + $0x48] sm:$0xff]
    %v1946 = vld [vmem:[%s1935 + $0x50] sm:$0xff]
    %v1947 = vld [vmem:[%s1935 + $0x58] sm:$0xff]
    %v1948 = vld [vmem:[%s1935 + $0x60] sm:$0xff]
    %v1949 = vld [vmem:[%s1935 + $0x68] sm:$0xff]
    %v1950 = vld [vmem:[%s1935 + $0x70] sm:$0xff]
    %v1951 = vld [vmem:[%s1935 + $0x78] sm:$0xff]
    %1952 = vmatpush.msra.mxu0 %v1951
    %1953 = vmatpush.msra.mxu0 %v1950
    %1954 = vmatpush.msra.mxu0 %v1949
    %1955 = vmatpush.msra.mxu0 %v1948
    %1956 = vmatpush.msra.mxu0 %v1947
    %1957 = vmatpush.msra.mxu0 %v1946
    %1958 = vmatpush.msra.mxu0 %v1945
    %1959 = vmatpush.msra.mxu0 %v1944
    %1960 = vmatpush.msra.mxu0 %v1943
    %1961 = vmatpush.msra.mxu0 %v1942
    %1962 = vmatpush.msra.mxu0 %v1941
    %1963 = vmatpush.msra.mxu0 %v1940
    %1964 = vmatpush.msra.mxu0 %v1939
    %1965 = vmatpush.msra.mxu0 %v1938
    %1966 = vmatpush.msra.mxu0 %v1937
    %1967 = vmatpush.msra.mxu0 %v1936
    %1968 = vmatmul.f32.gmra.mxu0 %v1676
    %v1969 = vpop.f32.mrf.mxu0
    %v1970 = vadd.f32 0.0, %v1969
    %1971 = vdwg.mxu0
    %v1972 = vadd.f32 %v1934, %v1970
    %s1973 = scalar_lea.vmem %s2, 896
    %v1974 = vld [vmem:[%s1973] sm:$0xff]
    %v1975 = vld [vmem:[%s1973 + $0x8] sm:$0xff]
    %v1976 = vld [vmem:[%s1973 + $0x10] sm:$0xff]
    %v1977 = vld [vmem:[%s1973 + $0x18] sm:$0xff]
    %v1978 = vld [vmem:[%s1973 + $0x20] sm:$0xff]
    %v1979 = vld [vmem:[%s1973 + $0x28] sm:$0xff]
    %v1980 = vld [vmem:[%s1973 + $0x30] sm:$0xff]
    %v1981 = vld [vmem:[%s1973 + $0x38] sm:$0xff]
    %v1982 = vld [vmem:[%s1973 + $0x40] sm:$0xff]
    %v1983 = vld [vmem:[%s1973 + $0x48] sm:$0xff]
    %v1984 = vld [vmem:[%s1973 + $0x50] sm:$0xff]
    %v1985 = vld [vmem:[%s1973 + $0x58] sm:$0xff]
    %v1986 = vld [vmem:[%s1973 + $0x60] sm:$0xff]
    %v1987 = vld [vmem:[%s1973 + $0x68] sm:$0xff]
    %v1988 = vld [vmem:[%s1973 + $0x70] sm:$0xff]
    %v1989 = vld [vmem:[%s1973 + $0x78] sm:$0xff]
    %1990 = vmatpush.msra.mxu0 %v1989
    %1991 = vmatpush.msra.mxu0 %v1988
    %1992 = vmatpush.msra.mxu0 %v1987
    %1993 = vmatpush.msra.mxu0 %v1986
    %1994 = vmatpush.msra.mxu0 %v1985
    %1995 = vmatpush.msra.mxu0 %v1984
    %1996 = vmatpush.msra.mxu0 %v1983
    %1997 = vmatpush.msra.mxu0 %v1982
    %1998 = vmatpush.msra.mxu0 %v1981
    %1999 = vmatpush.msra.mxu0 %v1980
    %2000 = vmatpush.msra.mxu0 %v1979
    %2001 = vmatpush.msra.mxu0 %v1978
    %2002 = vmatpush.msra.mxu0 %v1977
    %2003 = vmatpush.msra.mxu0 %v1976
    %2004 = vmatpush.msra.mxu0 %v1975
    %2005 = vmatpush.msra.mxu0 %v1974
    %2006 = vmatmul.f32.gmra.mxu0 %v1684
    %v2007 = vpop.f32.mrf.mxu0
    %v2008 = vadd.f32 0.0, %v2007
    %2009 = vdwg.mxu0
    %v2010 = vadd.f32 %v1972, %v2008
    %s2011 = scalar_lea.vmem %s2, 1024
    %v2012 = vld [vmem:[%s2011] sm:$0xff]
    %v2013 = vld [vmem:[%s2011 + $0x8] sm:$0xff]
    %v2014 = vld [vmem:[%s2011 + $0x10] sm:$0xff]
    %v2015 = vld [vmem:[%s2011 + $0x18] sm:$0xff]
    %v2016 = vld [vmem:[%s2011 + $0x20] sm:$0xff]
    %v2017 = vld [vmem:[%s2011 + $0x28] sm:$0xff]
    %v2018 = vld [vmem:[%s2011 + $0x30] sm:$0xff]
    %v2019 = vld [vmem:[%s2011 + $0x38] sm:$0xff]
    %v2020 = vld [vmem:[%s2011 + $0x40] sm:$0xff]
    %v2021 = vld [vmem:[%s2011 + $0x48] sm:$0xff]
    %v2022 = vld [vmem:[%s2011 + $0x50] sm:$0xff]
    %v2023 = vld [vmem:[%s2011 + $0x58] sm:$0xff]
    %v2024 = vld [vmem:[%s2011 + $0x60] sm:$0xff]
    %v2025 = vld [vmem:[%s2011 + $0x68] sm:$0xff]
    %v2026 = vld [vmem:[%s2011 + $0x70] sm:$0xff]
    %v2027 = vld [vmem:[%s2011 + $0x78] sm:$0xff]
    %2028 = vmatpush.msra.mxu0 %v2027
    %2029 = vmatpush.msra.mxu0 %v2026
    %2030 = vmatpush.msra.mxu0 %v2025
    %2031 = vmatpush.msra.mxu0 %v2024
    %2032 = vmatpush.msra.mxu0 %v2023
    %2033 = vmatpush.msra.mxu0 %v2022
    %2034 = vmatpush.msra.mxu0 %v2021
    %2035 = vmatpush.msra.mxu0 %v2020
    %2036 = vmatpush.msra.mxu0 %v2019
    %2037 = vmatpush.msra.mxu0 %v2018
    %2038 = vmatpush.msra.mxu0 %v2017
    %2039 = vmatpush.msra.mxu0 %v2016
    %2040 = vmatpush.msra.mxu0 %v2015
    %2041 = vmatpush.msra.mxu0 %v2014
    %2042 = vmatpush.msra.mxu0 %v2013
    %2043 = vmatpush.msra.mxu0 %v2012
    %2044 = vmatmul.f32.gmra.mxu0 %v1691
    %v2045 = vpop.f32.mrf.mxu0
    %v2046 = vadd.f32 0.0, %v2045
    %2047 = vdwg.mxu0
    %v2048 = vadd.f32 %v2010, %v2046
    %s2049 = scalar_lea.vmem %s2, 1152
    %v2050 = vld [vmem:[%s2049] sm:$0xff]
    %v2051 = vld [vmem:[%s2049 + $0x8] sm:$0xff]
    %v2052 = vld [vmem:[%s2049 + $0x10] sm:$0xff]
    %v2053 = vld [vmem:[%s2049 + $0x18] sm:$0xff]
    %v2054 = vld [vmem:[%s2049 + $0x20] sm:$0xff]
    %v2055 = vld [vmem:[%s2049 + $0x28] sm:$0xff]
    %v2056 = vld [vmem:[%s2049 + $0x30] sm:$0xff]
    %v2057 = vld [vmem:[%s2049 + $0x38] sm:$0xff]
    %v2058 = vld [vmem:[%s2049 + $0x40] sm:$0xff]
    %v2059 = vld [vmem:[%s2049 + $0x48] sm:$0xff]
    %v2060 = vld [vmem:[%s2049 + $0x50] sm:$0xff]
    %v2061 = vld [vmem:[%s2049 + $0x58] sm:$0xff]
    %v2062 = vld [vmem:[%s2049 + $0x60] sm:$0xff]
    %v2063 = vld [vmem:[%s2049 + $0x68] sm:$0xff]
    %v2064 = vld [vmem:[%s2049 + $0x70] sm:$0xff]
    %v2065 = vld [vmem:[%s2049 + $0x78] sm:$0xff]
    %2066 = vmatpush.msra.mxu0 %v2065
    %2067 = vmatpush.msra.mxu0 %v2064
    %2068 = vmatpush.msra.mxu0 %v2063
    %2069 = vmatpush.msra.mxu0 %v2062
    %2070 = vmatpush.msra.mxu0 %v2061
    %2071 = vmatpush.msra.mxu0 %v2060
    %2072 = vmatpush.msra.mxu0 %v2059
    %2073 = vmatpush.msra.mxu0 %v2058
    %2074 = vmatpush.msra.mxu0 %v2057
    %2075 = vmatpush.msra.mxu0 %v2056
    %2076 = vmatpush.msra.mxu0 %v2055
    %2077 = vmatpush.msra.mxu0 %v2054
    %2078 = vmatpush.msra.mxu0 %v2053
    %2079 = vmatpush.msra.mxu0 %v2052
    %2080 = vmatpush.msra.mxu0 %v2051
    %2081 = vmatpush.msra.mxu0 %v2050
    %2082 = vmatmul.f32.gmra.mxu0 %v1699
    %v2083 = vpop.f32.mrf.mxu0
    %v2084 = vadd.f32 0.0, %v2083
    %2085 = vdwg.mxu0
    %v2086 = vadd.f32 %v2048, %v2084
    %v2087 = vld [vmem:[%s3] sm:$0x1]
    %v2089 = vperm.slane %v2087, 0
    %v2091 = vadd.f32 %v2086, %v2089
    %v2092 = vmax.f32 %v2091, 0.0
    %2093 = vst [vmem:[#allocation2] sm:$0xff] %v2092
    // Predicated region
    $region18: #{tpu_custom_call.1} parent=1 // pred_check
      _
    $region19: #{tpu_custom_call.1} parent=1 // pred_check_branch
      %2095 = sbr.rel (0) target = $region21
    $region20: #{tpu_custom_call.1} parent=1 // pred_region
      %2097 = vsyncadd [#allocation3], 0
      %s2099 = sshll.u32 [#allocation2], 4
      %s2100 = int_to_ptr.vmem [resolvable:$true] %s2099
      %s2101 = sshll.u32 %s4, 4
      %s2102 = int_to_ptr.hbm [resolvable:$true] %s2101
      %2104 = dma.vmem_to_hbm [thread:$0]  %s2100, 128, %s2102, [#allocation3]
    $region21: #{tpu_custom_call.1} parent=1 // pred_fallthru
      _
    // Predicated region
    $region22: #{tpu_custom_call.1} parent=1 // pred_check
      _
    $region23: #{tpu_custom_call.1} parent=1 // pred_check_branch
      %2106 = sbr.rel (0) target = $region25
    $region24: #{tpu_custom_call.1} parent=1 // pred_region
      %2108 = dma.done [#allocation3], 128
    $region25: #{tpu_custom_call.1} parent=1 // pred_fallthru
      _
    %2109 = vsyncpa [#allocation3], 1

</llo_original>
